<compile_context>
chip_gen: v5e
topology: v5e:2x2
jax: 0.10.0
libtpu: 0.0.40
codegen_flags: <defaults>
</compile_context>

<pallas_src>
import functools

import jax
import jax.numpy as jnp
from jax.experimental import pallas as pl
from jax.experimental.pallas import tpu as pltpu

POLY_ORDER = 2   # poly terms  : [1, u, u^2]
DIFF_ORDER = 2   # deriv terms : [1, u_x, u_xx]
N_TERMS = (POLY_ORDER + 1) * (DIFF_ORDER + 1)   # 9 library terms
N_OUT_ROWS = 2 + N_TERMS                        # u, u_t, 9 theta rows


def _deepmod_kernel(xT_ref,
                    w1t_ref, b1_ref, w2t_ref, b2_ref, w3t_ref, b3_ref,
                    out_ref):
    # Lane-dense layout: samples in the lane (last) dim.
    t_row = xT_ref[0:1, :]                      # (1, T)  t coordinate
    x_row = xT_ref[1:2, :]                      # (1, T)  x coordinate
    T = t_row.shape[1]

    # ---- layer 1 (Linear + Tanh): input width is 2 and the derivative seeds are
    # one-hot columns, so no matmuls are needed (pure VPU broadcast FMAs).
    w1t = w1t_ref[...]                          # (d1, 2)  = W1^T
    b1 = b1_ref[...]                            # (d1, 1)
    d1 = w1t.shape[0]

    # Hoist + materialize lane broadcasts once (no broadcast_in_dim re-emission).
    wt_b = jnp.broadcast_to(w1t[:, 0:1], (d1, T))    # dz/dt column, (d1, T)
    wx_b = jnp.broadcast_to(w1t[:, 1:2], (d1, T))    # dz/dx column, (d1, T)
    b1_b = jnp.broadcast_to(b1, (d1, T))
    neg2wx_b = -2.0 * wx_b

    z = wt_b * t_row + wx_b * x_row + b1_b      # (d1, T)
    y = jnp.tanh(z)
    s = 1.0 - y * y                             # tanh'
    a = y
    a_t = s * wt_b                              # z_t = wt (broadcast)
    a_x = s * wx_b                              # z_x = wx (broadcast)
    a_xx = neg2wx_b * (y * a_x)                 # z_xx = 0  ->  y_xx = -2*y*z_x*y_x

    def linear4(a, a_t, a_x, a_xx, wt, b):
        # 4 separate MXU dots (bias only on the value stream).  No (d, 4*T) concat
        # buffer is materialized -> far fewer vreg loads/stores; the (32,32)/(1,32)
        # weight re-push is negligible.
        z = jnp.dot(wt, a, preferred_element_type=jnp.float32) + b
        z_t = jnp.dot(wt, a_t, preferred_element_type=jnp.float32)
        z_x = jnp.dot(wt, a_x, preferred_element_type=jnp.float32)
        z_xx = jnp.dot(wt, a_xx, preferred_element_type=jnp.float32)
        return z, z_t, z_x, z_xx

    def tanh_chain(z, z_t, z_x, z_xx):
        y = jnp.tanh(z)
        s = 1.0 - y * y
        y_t = s * z_t
        y_x = s * z_x                           # reuse y_x = s*z_x below
        y_xx = s * z_xx - 2.0 * y * z_x * y_x
        return y, y_t, y_x, y_xx

    # ---- layer 2 (Linear + Tanh)
    a, a_t, a_x, a_xx = tanh_chain(*linear4(a, a_t, a_x, a_xx,
                                            w2t_ref[...], b2_ref[...]))
    # ---- output layer (final Tanh is popped in build_network)
    u, u_t, u_x, u_xx = linear4(a, a_t, a_x, a_xx, w3t_ref[...], b3_ref[...])

    # Single merged lane-dense output block:
    #   row 0 = u (prediction), row 1 = u_t (time deriv), rows 2..10 = theta columns
    #   theta order = [1, u, u^2, u_x, u*u_x, u^2*u_x, u_xx, u*u_xx, u^2*u_xx]
    u2 = u * u
    out_ref[0:1, :] = u
    out_ref[1:2, :] = u_t
    out_ref[2:3, :] = jnp.ones_like(u)
    out_ref[3:4, :] = u
    out_ref[4:5, :] = u2
    out_ref[5:6, :] = u_x
    out_ref[6:7, :] = u * u_x
    out_ref[7:8, :] = u2 * u_x
    out_ref[8:9, :] = u_xx
    out_ref[9:10, :] = u * u_xx
    out_ref[10:11, :] = u2 * u_xx


def _tensorcores_per_device():
    """Best-effort detection of TensorCores per chip (v7x / megacore chips = 2)."""
    try:
        kind = jax.devices()[0].device_kind.lower()
    except Exception:
        return 1
    if "v4" in kind or "v7" in kind or "7x" in kind:
        return 2
    return 1


def _choose_tile(N, requested, n_cores):
    """Lane-dense tile: multiple of 128 dividing N.

    Single-TC chips (v5e/v6e): just pick the largest tile <= requested (grid may be 1).
    Dual-TC chips (v7x): prefer an even grid >= 2 so both cores get equal work.
    """
    if N % 128:
        return N
    candidates = [t for t in range(128, N + 1, 128) if N % t == 0]
    cap = max(128, min(requested, N))

    def pick(grid_ok):
        ok = [t for t in candidates if t <= cap and grid_ok(N // t)]
        return max(ok) if ok else None

    if n_cores >= 2:
        t = pick(lambda g: g >= 2 and g % 2 == 0)
        if t is not None:
            return t
    t = pick(lambda g: True)
    return t if t is not None else N


@functools.partial(jax.jit, static_argnames=("tile",))
def deepmod_forward(x, params, coeff_vector, *, tile=2048):
    """Returns (prediction, time_deriv_list, sparse_theta_list, coeff_vector_list)."""
    N, n_in = x.shape
    assert n_in == 2, "1D library assumes (t, x) input columns"
    assert N % 128 == 0, "sample count must be a multiple of the 128-lane width"
    (w1, b1), (w2, b2), (w3, b3) = params
    n_out = w3.shape[1]
    assert n_out == 1, "library (poly x deriv, width 9) assumes a single output field"

    t = _choose_tile(N, tile, _tensorcores_per_device())
    grid = (N // t,)

    # Layout plumbing (cheap XLA ops outside the kernel): sample axis -> lane axis,
    # weights as (d_out, d_in), biases as columns.
    xT = x.T                                    # (2, N)
    w1t, w2t, w3t = w1.T, w2.T, w3.T
    b1c, b2c, b3c = b1[:, None], b2[:, None], b3[:, None]

    def full_spec(shape):
        return pl.BlockSpec(shape, lambda i, _n=len(shape): (0,) * _n)

    merged = pl.pallas_call(
        _deepmod_kernel,
        out_shape=jax.ShapeDtypeStruct((N_OUT_ROWS, N), jnp.float32),
        grid_spec=pltpu.PrefetchScalarGridSpec(
            num_scalar_prefetch=0,
            grid=grid,
            in_specs=[pl.BlockSpec((n_in, t), lambda i: (0, i)),
                      full_spec(w1t.shape), full_spec(b1c.shape),
                      full_spec(w2t.shape), full_spec(b2c.shape),
                      full_spec(w3t.shape), full_spec(b3c.shape)],
            out_specs=pl.BlockSpec((N_OUT_ROWS, t), lambda i: (0, i))),
        compiler_params=pltpu.CompilerParams(
            dimension_semantics=("parallel",)),
    )(xT, w1t, b1c, w2t, b2c, w3t, b3c)

    # Wrapper-side layout restore required by the module's return convention (N, .).
    merged_nt = merged.T                        # (N, 11)
    prediction = merged_nt[:, 0:1]              # (N, 1)
    time_deriv = [merged_nt[:, 1:2]]            # [(N, 1)]
    # Fitting layer: sparsity_mask is the full arange(n_terms) -> sparse_theta == theta
    sparse_theta = [merged_nt[:, 2:]]           # [(N, 9)]
    return prediction, time_deriv, sparse_theta, [coeff_vector]


# ----------------------- deterministic parameter construction -----------------------
def init_params(key, dims):
    """PyTorch nn.Linear-style uniform(-1/sqrt(fan_in), 1/sqrt(fan_in)) init."""
    params = []
    for d_in, d_out in zip(dims[:-1], dims[1:]):
        key, kw, kb = jax.random.split(key, 3)
        bound = 1.0 / jnp.sqrt(d_in)
        w = jax.random.uniform(kw, (d_in, d_out), jnp.float32, -bound, bound)
        b = jax.random.uniform(kb, (d_out,), jnp.float32, -bound, bound)
        params.append((w, b))
    return key, params


# ----------------------- pure-JAX reference (for correctness check) -----------------------
def _mlp_ref(params, x):
    a = x
    for (w, b) in params[:-1]:
        a = jnp.tanh(a @ w + b)
    w, b = params[-1]
    return a @ w + b


def _ref_forward(params, x, coeff_vector):
    u = _mlp_ref(params, x)

    def f_single(xi):
        return _mlp_ref(params, xi[None, :])[0]          # (n_out,)

    et = jnp.array([1.0, 0.0], jnp.float32)
    ex = jnp.array([0.0, 1.0], jnp.float32)
    u_t = jax.vmap(lambda xi: jax.jvp(f_single, (xi,), (et,))[1])(x)
    fx = lambda xi: jax.jvp(f_single, (xi,), (ex,))[1]
    u_x = jax.vmap(fx)(x)
    u_xx = jax.vmap(lambda xi: jax.jvp(fx, (xi,), (ex,))[1])(x)

    ones = jnp.ones_like(u)
    poly = jnp.concatenate([ones, u, u * u], axis=1)
    theta = jnp.concatenate([d * poly for d in (ones, u_x, u_xx)], axis=1)
    return u, [u_t], [theta], [coeff_vector]


if __name__ == "__main__":
    key = jax.random.PRNGKey(0)

    # Small DeepMod config: n_in=2 (t, x), hidden_dims=[32, 32], n_out=1
    n_in, hidden_dims, n_out = 2, [32, 32], 1
    key, params = init_params(key, [n_in] + hidden_dims + [n_out])

    # Fitting layer coeff_vector: (n_terms, n_out) per equation (torch.rand-style init)
    key, kc, kx = jax.random.split(key, 3)
    coeff_vector = jax.random.uniform(kc, (N_TERMS, n_out), jnp.float32)

    # Sample input (N, 2)
    N = 1024
    x = jax.random.normal(kx, (N, n_in), jnp.float32)

    pred, time_deriv, sparse_theta, coeffs = deepmod_forward(x, params, coeff_vector)
    jax.block_until_ready((pred, time_deriv, sparse_theta, coeffs))

    # Sanity check against pure-JAX autodiff reference
    rp, rdt, rth, rc = _ref_forward(params, x, coeff_vector)
    assert pred.shape == (N, n_out) and time_deriv[0].shape == (N, n_out)
    assert sparse_theta[0].shape == (N, N_TERMS) and coeffs[0].shape == (N_TERMS, n_out)
    for a, b in [(pred, rp), (time_deriv[0], rdt[0]), (sparse_theta[0], rth[0])]:
        assert jnp.allclose(a, b, atol=2e-3, rtol=2e-3), float(jnp.max(jnp.abs(a - b)))

    print("KERNEL_OK")
</pallas_src>

<mosaic_0001>
module attributes {stable_mosaic.version = 11 : i64} {
  func.func @_deepmod_kernel(%arg0: i32, %arg1: memref<2x1024xf32, #tpu.memory_space<vmem>>, %arg2: memref<32x2xf32, #tpu.memory_space<vmem>>, %arg3: memref<32x1xf32, #tpu.memory_space<vmem>>, %arg4: memref<32x32xf32, #tpu.memory_space<vmem>>, %arg5: memref<32x1xf32, #tpu.memory_space<vmem>>, %arg6: memref<1x32xf32, #tpu.memory_space<vmem>>, %arg7: memref<1x1xf32, #tpu.memory_space<vmem>>, %arg8: memref<11x1024xf32, #tpu.memory_space<vmem>>) attributes {dimension_semantics = [#tpu.dimension_semantics<parallel>], iteration_bounds = array<i64: 1>, scalar_prefetch = 0 : i64, scratch_operands = 0 : i64, tpu.core_type = #tpu.core_type<tc>, window_params = [{transform_indices = @transform_0, window_bounds = array<i64: 2, 1024>}, {pipeline_mode = #tpu.pipeline_mode<synchronous>, transform_indices = @transform_1, window_bounds = array<i64: 32, 2>}, {pipeline_mode = #tpu.pipeline_mode<synchronous>, transform_indices = @transform_2, window_bounds = array<i64: 32, 1>}, {pipeline_mode = #tpu.pipeline_mode<synchronous>, transform_indices = @transform_3, window_bounds = array<i64: 32, 32>}, {pipeline_mode = #tpu.pipeline_mode<synchronous>, transform_indices = @transform_4, window_bounds = array<i64: 32, 1>}, {pipeline_mode = #tpu.pipeline_mode<synchronous>, transform_indices = @transform_5, window_bounds = array<i64: 1, 32>}, {pipeline_mode = #tpu.pipeline_mode<synchronous>, transform_indices = @transform_6, window_bounds = array<i64: 1, 1>}, {transform_indices = @transform_7, window_bounds = array<i64: 11, 1024>}]} {
    %c0 = arith.constant 0 : index
    %c0_0 = arith.constant 0 : index
    %0 = vector.load %arg1[%c0, %c0_0] : memref<2x1024xf32, #tpu.memory_space<vmem>>, vector<1x1024xf32>
    %c1 = arith.constant 1 : index
    %c0_1 = arith.constant 0 : index
    %1 = vector.load %arg1[%c1, %c0_1] : memref<2x1024xf32, #tpu.memory_space<vmem>>, vector<1x1024xf32>
    %c0_2 = arith.constant 0 : index
    %c0_3 = arith.constant 0 : index
    %2 = vector.load %arg2[%c0_2, %c0_3] : memref<32x2xf32, #tpu.memory_space<vmem>>, vector<32x2xf32>
    %c0_4 = arith.constant 0 : index
    %c0_5 = arith.constant 0 : index
    %3 = vector.load %arg3[%c0_4, %c0_5] : memref<32x1xf32, #tpu.memory_space<vmem>>, vector<32x1xf32>
    %4 = vector.extract_strided_slice %2 {offsets = [0, 0], sizes = [32, 1], strides = [1, 1]} : vector<32x2xf32> to vector<32x1xf32>
    %5 = vector.shape_cast %4 : vector<32x1xf32> to vector<32x1xf32>
    %6 = vector.broadcast %5 : vector<32x1xf32> to vector<32x1024xf32>
    %7 = vector.extract_strided_slice %2 {offsets = [0, 1], sizes = [32, 1], strides = [1, 1]} : vector<32x2xf32> to vector<32x1xf32>
    %8 = vector.shape_cast %7 : vector<32x1xf32> to vector<32x1xf32>
    %9 = vector.broadcast %8 : vector<32x1xf32> to vector<32x1024xf32>
    %10 = vector.shape_cast %3 : vector<32x1xf32> to vector<32x1xf32>
    %11 = vector.broadcast %10 : vector<32x1xf32> to vector<32x1024xf32>
    %cst = arith.constant -2.000000e+00 : f32
    %12 = vector.broadcast %cst : f32 to vector<32x1024xf32>
    %13 = arith.mulf %12, %9 : vector<32x1024xf32>
    %14 = vector.broadcast %0 : vector<1x1024xf32> to vector<32x1024xf32>
    %15 = arith.mulf %6, %14 : vector<32x1024xf32>
    %16 = vector.broadcast %1 : vector<1x1024xf32> to vector<32x1024xf32>
    %17 = arith.mulf %9, %16 : vector<32x1024xf32>
    %18 = arith.addf %15, %17 : vector<32x1024xf32>
    %19 = arith.addf %18, %11 : vector<32x1024xf32>
    %20 = math.tanh %19 : vector<32x1024xf32>
    %21 = arith.mulf %20, %20 : vector<32x1024xf32>
    %cst_6 = arith.constant 1.000000e+00 : f32
    %22 = vector.broadcast %cst_6 : f32 to vector<32x1024xf32>
    %23 = arith.subf %22, %21 : vector<32x1024xf32>
    %24 = arith.mulf %23, %6 : vector<32x1024xf32>
    %25 = arith.mulf %23, %9 : vector<32x1024xf32>
    %26 = arith.mulf %20, %25 : vector<32x1024xf32>
    %27 = arith.mulf %13, %26 : vector<32x1024xf32>
    %c0_7 = arith.constant 0 : index
    %c0_8 = arith.constant 0 : index
    %28 = vector.load %arg4[%c0_7, %c0_8] : memref<32x32xf32, #tpu.memory_space<vmem>>, vector<32x32xf32>
    %c0_9 = arith.constant 0 : index
    %c0_10 = arith.constant 0 : index
    %29 = vector.load %arg5[%c0_9, %c0_10] : memref<32x1xf32, #tpu.memory_space<vmem>>, vector<32x1xf32>
    %cst_11 = arith.constant dense<0.000000e+00> : vector<32x1024xf32>
    %30 = tpu.matmul %28, %20, %cst_11 {dimension_numbers = #tpu.dot_dimension_numbers<[1], [0], [0], [1], [0, 0, 1, 1], [], []>} : vector<32x32xf32>, vector<32x1024xf32>, vector<32x1024xf32> -> vector<32x1024xf32>
    %31 = vector.broadcast %29 : vector<32x1xf32> to vector<32x1024xf32>
    %32 = arith.addf %30, %31 : vector<32x1024xf32>
    %cst_12 = arith.constant dense<0.000000e+00> : vector<32x1024xf32>
    %33 = tpu.matmul %28, %24, %cst_12 {dimension_numbers = #tpu.dot_dimension_numbers<[1], [0], [0], [1], [0, 0, 1, 1], [], []>} : vector<32x32xf32>, vector<32x1024xf32>, vector<32x1024xf32> -> vector<32x1024xf32>
    %cst_13 = arith.constant dense<0.000000e+00> : vector<32x1024xf32>
    %34 = tpu.matmul %28, %25, %cst_13 {dimension_numbers = #tpu.dot_dimension_numbers<[1], [0], [0], [1], [0, 0, 1, 1], [], []>} : vector<32x32xf32>, vector<32x1024xf32>, vector<32x1024xf32> -> vector<32x1024xf32>
    %cst_14 = arith.constant dense<0.000000e+00> : vector<32x1024xf32>
    %35 = tpu.matmul %28, %27, %cst_14 {dimension_numbers = #tpu.dot_dimension_numbers<[1], [0], [0], [1], [0, 0, 1, 1], [], []>} : vector<32x32xf32>, vector<32x1024xf32>, vector<32x1024xf32> -> vector<32x1024xf32>
    %36 = math.tanh %32 : vector<32x1024xf32>
    %37 = arith.mulf %36, %36 : vector<32x1024xf32>
    %cst_15 = arith.constant 1.000000e+00 : f32
    %38 = vector.broadcast %cst_15 : f32 to vector<32x1024xf32>
    %39 = arith.subf %38, %37 : vector<32x1024xf32>
    %40 = arith.mulf %39, %33 : vector<32x1024xf32>
    %41 = arith.mulf %39, %34 : vector<32x1024xf32>
    %42 = arith.mulf %39, %35 : vector<32x1024xf32>
    %cst_16 = arith.constant 2.000000e+00 : f32
    %43 = vector.broadcast %cst_16 : f32 to vector<32x1024xf32>
    %44 = arith.mulf %43, %36 : vector<32x1024xf32>
    %45 = arith.mulf %44, %34 : vector<32x1024xf32>
    %46 = arith.mulf %45, %41 : vector<32x1024xf32>
    %47 = arith.subf %42, %46 : vector<32x1024xf32>
    %c0_17 = arith.constant 0 : index
    %c0_18 = arith.constant 0 : index
    %48 = vector.load %arg6[%c0_17, %c0_18] : memref<1x32xf32, #tpu.memory_space<vmem>>, vector<1x32xf32>
    %c0_19 = arith.constant 0 : index
    %c0_20 = arith.constant 0 : index
    %49 = vector.load %arg7[%c0_19, %c0_20] : memref<1x1xf32, #tpu.memory_space<vmem>>, vector<1x1xf32>
    %cst_21 = arith.constant dense<0.000000e+00> : vector<1x1024xf32>
    %50 = tpu.matmul %48, %36, %cst_21 {dimension_numbers = #tpu.dot_dimension_numbers<[1], [0], [0], [1], [0, 0, 1, 1], [], []>} : vector<1x32xf32>, vector<32x1024xf32>, vector<1x1024xf32> -> vector<1x1024xf32>
    %51 = vector.broadcast %49 : vector<1x1xf32> to vector<1x1024xf32>
    %52 = arith.addf %50, %51 : vector<1x1024xf32>
    %cst_22 = arith.constant dense<0.000000e+00> : vector<1x1024xf32>
    %53 = tpu.matmul %48, %40, %cst_22 {dimension_numbers = #tpu.dot_dimension_numbers<[1], [0], [0], [1], [0, 0, 1, 1], [], []>} : vector<1x32xf32>, vector<32x1024xf32>, vector<1x1024xf32> -> vector<1x1024xf32>
    %cst_23 = arith.constant dense<0.000000e+00> : vector<1x1024xf32>
    %54 = tpu.matmul %48, %41, %cst_23 {dimension_numbers = #tpu.dot_dimension_numbers<[1], [0], [0], [1], [0, 0, 1, 1], [], []>} : vector<1x32xf32>, vector<32x1024xf32>, vector<1x1024xf32> -> vector<1x1024xf32>
    %cst_24 = arith.constant dense<0.000000e+00> : vector<1x1024xf32>
    %55 = tpu.matmul %48, %47, %cst_24 {dimension_numbers = #tpu.dot_dimension_numbers<[1], [0], [0], [1], [0, 0, 1, 1], [], []>} : vector<1x32xf32>, vector<32x1024xf32>, vector<1x1024xf32> -> vector<1x1024xf32>
    %56 = arith.mulf %52, %52 : vector<1x1024xf32>
    %c0_25 = arith.constant 0 : index
    %c0_26 = arith.constant 0 : index
    %57 = vector.load %arg8[%c0_25, %c0_26] : memref<11x1024xf32, #tpu.memory_space<vmem>>, vector<1x1024xf32>
    tpu.vector_store %arg8[%c0_25, %c0_26], %52 {strides = array<i32>} : memref<11x1024xf32, #tpu.memory_space<vmem>>, vector<1x1024xf32>,
    %c1_27 = arith.constant 1 : index
    %c0_28 = arith.constant 0 : index
    %58 = vector.load %arg8[%c1_27, %c0_28] : memref<11x1024xf32, #tpu.memory_space<vmem>>, vector<1x1024xf32>
    tpu.vector_store %arg8[%c1_27, %c0_28], %53 {strides = array<i32>} : memref<11x1024xf32, #tpu.memory_space<vmem>>, vector<1x1024xf32>,
    %cst_29 = arith.constant 1.000000e+00 : f32
    %59 = vector.broadcast %cst_29 : f32 to vector<1x1024xf32>
    %c2 = arith.constant 2 : index
    %c0_30 = arith.constant 0 : index
    %60 = vector.load %arg8[%c2, %c0_30] : memref<11x1024xf32, #tpu.memory_space<vmem>>, vector<1x1024xf32>
    tpu.vector_store %arg8[%c2, %c0_30], %59 {strides = array<i32>} : memref<11x1024xf32, #tpu.memory_space<vmem>>, vector<1x1024xf32>,
    %c3 = arith.constant 3 : index
    %c0_31 = arith.constant 0 : index
    %61 = vector.load %arg8[%c3, %c0_31] : memref<11x1024xf32, #tpu.memory_space<vmem>>, vector<1x1024xf32>
    tpu.vector_store %arg8[%c3, %c0_31], %52 {strides = array<i32>} : memref<11x1024xf32, #tpu.memory_space<vmem>>, vector<1x1024xf32>,
    %c4 = arith.constant 4 : index
    %c0_32 = arith.constant 0 : index
    %62 = vector.load %arg8[%c4, %c0_32] : memref<11x1024xf32, #tpu.memory_space<vmem>>, vector<1x1024xf32>
    tpu.vector_store %arg8[%c4, %c0_32], %56 {strides = array<i32>} : memref<11x1024xf32, #tpu.memory_space<vmem>>, vector<1x1024xf32>,
    %c5 = arith.constant 5 : index
    %c0_33 = arith.constant 0 : index
    %63 = vector.load %arg8[%c5, %c0_33] : memref<11x1024xf32, #tpu.memory_space<vmem>>, vector<1x1024xf32>
    tpu.vector_store %arg8[%c5, %c0_33], %54 {strides = array<i32>} : memref<11x1024xf32, #tpu.memory_space<vmem>>, vector<1x1024xf32>,
    %64 = arith.mulf %52, %54 : vector<1x1024xf32>
    %c6 = arith.constant 6 : index
    %c0_34 = arith.constant 0 : index
    %65 = vector.load %arg8[%c6, %c0_34] : memref<11x1024xf32, #tpu.memory_space<vmem>>, vector<1x1024xf32>
    tpu.vector_store %arg8[%c6, %c0_34], %64 {strides = array<i32>} : memref<11x1024xf32, #tpu.memory_space<vmem>>, vector<1x1024xf32>,
    %66 = arith.mulf %56, %54 : vector<1x1024xf32>
    %c7 = arith.constant 7 : index
    %c0_35 = arith.constant 0 : index
    %67 = vector.load %arg8[%c7, %c0_35] : memref<11x1024xf32, #tpu.memory_space<vmem>>, vector<1x1024xf32>
    tpu.vector_store %arg8[%c7, %c0_35], %66 {strides = array<i32>} : memref<11x1024xf32, #tpu.memory_space<vmem>>, vector<1x1024xf32>,
    %c8 = arith.constant 8 : index
    %c0_36 = arith.constant 0 : index
    %68 = vector.load %arg8[%c8, %c0_36] : memref<11x1024xf32, #tpu.memory_space<vmem>>, vector<1x1024xf32>
    tpu.vector_store %arg8[%c8, %c0_36], %55 {strides = array<i32>} : memref<11x1024xf32, #tpu.memory_space<vmem>>, vector<1x1024xf32>,
    %69 = arith.mulf %52, %55 : vector<1x1024xf32>
    %c9 = arith.constant 9 : index
    %c0_37 = arith.constant 0 : index
    %70 = vector.load %arg8[%c9, %c0_37] : memref<11x1024xf32, #tpu.memory_space<vmem>>, vector<1x1024xf32>
    tpu.vector_store %arg8[%c9, %c0_37], %69 {strides = array<i32>} : memref<11x1024xf32, #tpu.memory_space<vmem>>, vector<1x1024xf32>,
    %71 = arith.mulf %56, %55 : vector<1x1024xf32>
    %c10 = arith.constant 10 : index
    %c0_38 = arith.constant 0 : index
    %72 = vector.load %arg8[%c10, %c0_38] : memref<11x1024xf32, #tpu.memory_space<vmem>>, vector<1x1024xf32>
    tpu.vector_store %arg8[%c10, %c0_38], %71 {strides = array<i32>} : memref<11x1024xf32, #tpu.memory_space<vmem>>, vector<1x1024xf32>,
    return
  }
  func.func @transform_0(%arg0: i32) -> (i32, i32) {
    %c0_i32 = arith.constant 0 : i32
    %c0_i32_0 = arith.constant 0 : i32
    return %c0_i32, %arg0 : i32, i32
  }
  func.func @transform_1(%arg0: i32) -> (i32, i32) {
    %c0_i32 = arith.constant 0 : i32
    %c0_i32_0 = arith.constant 0 : i32
    %c0_i32_1 = arith.constant 0 : i32
    return %c0_i32, %c0_i32_0 : i32, i32
  }
  func.func @transform_2(%arg0: i32) -> (i32, i32) {
    %c0_i32 = arith.constant 0 : i32
    %c0_i32_0 = arith.constant 0 : i32
    %c0_i32_1 = arith.constant 0 : i32
    return %c0_i32, %c0_i32_0 : i32, i32
  }
  func.func @transform_3(%arg0: i32) -> (i32, i32) {
    %c0_i32 = arith.constant 0 : i32
    %c0_i32_0 = arith.constant 0 : i32
    %c0_i32_1 = arith.constant 0 : i32
    return %c0_i32, %c0_i32_0 : i32, i32
  }
  func.func @transform_4(%arg0: i32) -> (i32, i32) {
    %c0_i32 = arith.constant 0 : i32
    %c0_i32_0 = arith.constant 0 : i32
    %c0_i32_1 = arith.constant 0 : i32
    return %c0_i32, %c0_i32_0 : i32, i32
  }
  func.func @transform_5(%arg0: i32) -> (i32, i32) {
    %c0_i32 = arith.constant 0 : i32
    %c0_i32_0 = arith.constant 0 : i32
    %c0_i32_1 = arith.constant 0 : i32
    return %c0_i32, %c0_i32_0 : i32, i32
  }
  func.func @transform_6(%arg0: i32) -> (i32, i32) {
    %c0_i32 = arith.constant 0 : i32
    %c0_i32_0 = arith.constant 0 : i32
    %c0_i32_1 = arith.constant 0 : i32
    return %c0_i32, %c0_i32_0 : i32, i32
  }
  func.func @transform_7(%arg0: i32) -> (i32, i32) {
    %c0_i32 = arith.constant 0 : i32
    %c0_i32_0 = arith.constant 0 : i32
    return %c0_i32, %arg0 : i32, i32
  }
}

</mosaic_0001>

<llo_original>
// kernel: deepmod_forward.1
$region0: #{deepmod_forward.1}
  #allocation0 [shape = 'u32[]', space=smem, size = 0x4, offset = 0x4, fixed_abs, tag = 'smem constant byte address 0x4 - core index']
  #allocation1 [shape = 'u32[72,128]{1,0:T(1,128)}', space=vmem, size = 0x9000, scoped, tag = 'internal scratch']
  #allocation2 [shape = 'f32[1,1]{1,0:T(1,128)S(1)}', space=vmem, size = 0x200, scoped, tag = 'scoped memory for deepmod_forward.1']
  %s0 = inlined_call_operand.vmem [shape: f32[2,1024], index: 0, kind: input, shape index: {}]
  %s1 = inlined_call_operand.vmem [shape: f32[32,2], index: 1, kind: input, shape index: {}]
  %s2 = inlined_call_operand.vmem [shape: f32[32,1], index: 2, kind: input, shape index: {}]
  %s3 = inlined_call_operand.vmem [shape: f32[32,32], index: 3, kind: input, shape index: {}]
  %s4 = inlined_call_operand.vmem [shape: f32[32,1], index: 4, kind: input, shape index: {}]
  %s5 = inlined_call_operand.vmem [shape: f32[1,32], index: 5, kind: input, shape index: {}]
  %s6 = inlined_call_operand.<no memory space> [shape: f32[1,1], index: 6, kind: input, shape index: {}]
  %s7 = inlined_call_operand.vmem [shape: f32[11,1024], index: 7, kind: output, shape index: {}]
  %s8 = sld [smem:[#allocation0]]
  $region38: #{deepmod_forward.1} parent=0
    _
  %s10 = ssub.s32 1, %s8
  %s11 = scalar_select 0, %s10, %s8
  %v12 = vstv %s6
  %13 = vst [vmem:[#allocation2] sm:$0x1] %v12
  // Predicated region
  $region2: #{deepmod_forward.1} parent=0 // pred_check
    _
  $region3: #{deepmod_forward.1} parent=0 // pred_check_branch
    %15 = sbr.rel (0) target = $region5
  $region4: #{deepmod_forward.1} parent=0 // pred_region
    _
  $region5: #{deepmod_forward.1} parent=0 // pred_fallthru
    _
  // Predicated region
  $region6: #{deepmod_forward.1} parent=0 // pred_check
    _
  $region7: #{deepmod_forward.1} parent=0 // pred_check_branch
    %17 = sbr.rel (0) target = $region9
  $region8: #{deepmod_forward.1} parent=0 // pred_region
    _
  $region9: #{deepmod_forward.1} parent=0 // pred_fallthru
    _
  // Predicated region
  $region10: #{deepmod_forward.1} parent=0 // pred_check
    _
  $region11: #{deepmod_forward.1} parent=0 // pred_check_branch
    %19 = sbr.rel (0) target = $region13
  $region12: #{deepmod_forward.1} parent=0 // pred_region
    _
  $region13: #{deepmod_forward.1} parent=0 // pred_fallthru
    _
  // Predicated region
  $region14: #{deepmod_forward.1} parent=0 // pred_check
    _
  $region15: #{deepmod_forward.1} parent=0 // pred_check_branch
    %21 = sbr.rel (0) target = $region17
  $region16: #{deepmod_forward.1} parent=0 // pred_region
    _
  $region17: #{deepmod_forward.1} parent=0 // pred_fallthru
    _
  // Predicated region
  $region18: #{deepmod_forward.1} parent=0 // pred_check
    _
  $region19: #{deepmod_forward.1} parent=0 // pred_check_branch
    %23 = sbr.rel (0) target = $region21
  $region20: #{deepmod_forward.1} parent=0 // pred_region
    _
  $region21: #{deepmod_forward.1} parent=0 // pred_fallthru
    _
  // Predicated region
  $region22: #{deepmod_forward.1} parent=0 // pred_check
    _
  $region23: #{deepmod_forward.1} parent=0 // pred_check_branch
    %25 = sbr.rel (0) target = $region25
  $region24: #{deepmod_forward.1} parent=0 // pred_region
    _
  $region25: #{deepmod_forward.1} parent=0 // pred_fallthru
    _
  // Predicated region
  $region26: #{deepmod_forward.1} parent=0 // pred_check
    _
  $region27: #{deepmod_forward.1} parent=0 // pred_check_branch
    %27 = sbr.rel (0) target = $region29
  $region28: #{deepmod_forward.1} parent=0 // pred_region
    _
  $region29: #{deepmod_forward.1} parent=0 // pred_fallthru
    _
  %v28 = vld [vmem:[%s0] ss:$2 sm:$0xff]
  %s29 = scalar_lea.vmem %s0, 1
  %v30 = vld [vmem:[%s29] ss:$2 sm:$0xff]
  %v31 = vld [vmem:[%s1] sm:$0xff]
  %v32 = vld [vmem:[%s1 + $0x8] sm:$0xff]
  %v33 = vld [vmem:[%s1 + $0x10] sm:$0xff]
  %v34 = vld [vmem:[%s1 + $0x18] sm:$0xff]
  %v35 = vld [vmem:[%s2] sm:$0xff]
  %v36 = vld [vmem:[%s2 + $0x8] sm:$0xff]
  %v37 = vld [vmem:[%s2 + $0x10] sm:$0xff]
  %v38 = vld [vmem:[%s2 + $0x18] sm:$0xff]
  %40 = vset.pattern.permute.xlu0 0
  %41 = vperm.xlu0 %40, %v31
  %v42 = vpop.permute.xlu0 %41
  %45 = vset.pattern.permute.xlu0 0
  %46 = vperm.xlu0 %45, %v32
  %v47 = vpop.permute.xlu0 %46
  %50 = vset.pattern.permute.xlu0 0
  %51 = vperm.xlu0 %50, %v33
  %v52 = vpop.permute.xlu0 %51
  %55 = vset.pattern.permute.xlu0 0
  %56 = vperm.xlu0 %55, %v34
  %v57 = vpop.permute.xlu0 %56
  %59 = vset.pattern.permute.xlu0 1
  %60 = vperm.xlu0 %59, %v31
  %v61 = vpop.permute.xlu0 %60
  %63 = vset.pattern.permute.xlu0 1
  %64 = vperm.xlu0 %63, %v32
  %v65 = vpop.permute.xlu0 %64
  %67 = vset.pattern.permute.xlu0 1
  %68 = vperm.xlu0 %67, %v33
  %v69 = vpop.permute.xlu0 %68
  %71 = vset.pattern.permute.xlu0 1
  %72 = vperm.xlu0 %71, %v34
  %v73 = vpop.permute.xlu0 %72
  %76 = vset.pattern.permute.xlu0 0
  %77 = vperm.xlu0 %76, %v35
  %v78 = vpop.permute.xlu0 %77
  %81 = vset.pattern.permute.xlu0 0
  %82 = vperm.xlu0 %81, %v36
  %v83 = vpop.permute.xlu0 %82
  %86 = vset.pattern.permute.xlu0 0
  %87 = vperm.xlu0 %86, %v37
  %v88 = vpop.permute.xlu0 %87
  %91 = vset.pattern.permute.xlu0 0
  %92 = vperm.xlu0 %91, %v38
  %v93 = vpop.permute.xlu0 %92
  %v95 = vmul.f32 %v61, -2.0
  %v96 = vmul.f32 %v65, -2.0
  %v97 = vmul.f32 %v69, -2.0
  %v98 = vmul.f32 %v73, -2.0
  %v100 = vperm.slane %v28, 0
  %v101 = vperm.slane %v28, 1
  %v102 = vperm.slane %v28, 2
  %v103 = vperm.slane %v28, 3
  %v104 = vperm.slane %v28, 4
  %v105 = vperm.slane %v28, 5
  %v106 = vperm.slane %v28, 6
  %v107 = vperm.slane %v28, 7
  %v116 = vmul.f32 %v42, %v100
  %v117 = vmul.f32 %v42, %v101
  %v118 = vmul.f32 %v42, %v102
  %v119 = vmul.f32 %v42, %v103
  %v120 = vmul.f32 %v42, %v104
  %v121 = vmul.f32 %v42, %v105
  %v122 = vmul.f32 %v42, %v106
  %v123 = vmul.f32 %v42, %v107
  %v124 = vmul.f32 %v47, %v100
  %v125 = vmul.f32 %v47, %v101
  %v126 = vmul.f32 %v47, %v102
  %v127 = vmul.f32 %v47, %v103
  %v128 = vmul.f32 %v47, %v104
  %v129 = vmul.f32 %v47, %v105
  %v130 = vmul.f32 %v47, %v106
  %v131 = vmul.f32 %v47, %v107
  %v132 = vmul.f32 %v52, %v100
  %v133 = vmul.f32 %v52, %v101
  %v134 = vmul.f32 %v52, %v102
  %v135 = vmul.f32 %v52, %v103
  %v136 = vmul.f32 %v52, %v104
  %v137 = vmul.f32 %v52, %v105
  %v138 = vmul.f32 %v52, %v106
  %v139 = vmul.f32 %v52, %v107
  %v140 = vmul.f32 %v57, %v100
  %v141 = vmul.f32 %v57, %v101
  %v142 = vmul.f32 %v57, %v102
  %v143 = vmul.f32 %v57, %v103
  %v144 = vmul.f32 %v57, %v104
  %v145 = vmul.f32 %v57, %v105
  %v146 = vmul.f32 %v57, %v106
  %v147 = vmul.f32 %v57, %v107
  %v149 = vperm.slane %v30, 0
  %v150 = vperm.slane %v30, 1
  %v151 = vperm.slane %v30, 2
  %v152 = vperm.slane %v30, 3
  %v153 = vperm.slane %v30, 4
  %v154 = vperm.slane %v30, 5
  %v155 = vperm.slane %v30, 6
  %v156 = vperm.slane %v30, 7
  %v165 = vmul.f32 %v61, %v149
  %v166 = vmul.f32 %v61, %v150
  %v167 = vmul.f32 %v61, %v151
  %v168 = vmul.f32 %v61, %v152
  %v169 = vmul.f32 %v61, %v153
  %v170 = vmul.f32 %v61, %v154
  %v171 = vmul.f32 %v61, %v155
  %v172 = vmul.f32 %v61, %v156
  %v173 = vmul.f32 %v65, %v149
  %v174 = vmul.f32 %v65, %v150
  %v175 = vmul.f32 %v65, %v151
  %v176 = vmul.f32 %v65, %v152
  %v177 = vmul.f32 %v65, %v153
  %v178 = vmul.f32 %v65, %v154
  %v179 = vmul.f32 %v65, %v155
  %v180 = vmul.f32 %v65, %v156
  %v181 = vmul.f32 %v69, %v149
  %v182 = vmul.f32 %v69, %v150
  %v183 = vmul.f32 %v69, %v151
  %v184 = vmul.f32 %v69, %v152
  %v185 = vmul.f32 %v69, %v153
  %v186 = vmul.f32 %v69, %v154
  %v187 = vmul.f32 %v69, %v155
  %v188 = vmul.f32 %v69, %v156
  %v189 = vmul.f32 %v73, %v149
  %v190 = vmul.f32 %v73, %v150
  %v191 = vmul.f32 %v73, %v151
  %v192 = vmul.f32 %v73, %v152
  %v193 = vmul.f32 %v73, %v153
  %v194 = vmul.f32 %v73, %v154
  %v195 = vmul.f32 %v73, %v155
  %v196 = vmul.f32 %v73, %v156
  %v197 = vadd.f32 %v116, %v165
  %v198 = vadd.f32 %v117, %v166
  %v199 = vadd.f32 %v118, %v167
  %v200 = vadd.f32 %v119, %v168
  %v201 = vadd.f32 %v120, %v169
  %v202 = vadd.f32 %v121, %v170
  %v203 = vadd.f32 %v122, %v171
  %v204 = vadd.f32 %v123, %v172
  %v205 = vadd.f32 %v124, %v173
  %v206 = vadd.f32 %v125, %v174
  %v207 = vadd.f32 %v126, %v175
  %v208 = vadd.f32 %v127, %v176
  %v209 = vadd.f32 %v128, %v177
  %v210 = vadd.f32 %v129, %v178
  %v211 = vadd.f32 %v130, %v179
  %v212 = vadd.f32 %v131, %v180
  %v213 = vadd.f32 %v132, %v181
  %v214 = vadd.f32 %v133, %v182
  %v215 = vadd.f32 %v134, %v183
  %v216 = vadd.f32 %v135, %v184
  %v217 = vadd.f32 %v136, %v185
  %v218 = vadd.f32 %v137, %v186
  %v219 = vadd.f32 %v138, %v187
  %v220 = vadd.f32 %v139, %v188
  %v221 = vadd.f32 %v140, %v189
  %v222 = vadd.f32 %v141, %v190
  %v223 = vadd.f32 %v142, %v191
  %v224 = vadd.f32 %v143, %v192
  %v225 = vadd.f32 %v144, %v193
  %v226 = vadd.f32 %v145, %v194
  %v227 = vadd.f32 %v146, %v195
  %v228 = vadd.f32 %v147, %v196
  %v229 = vadd.f32 %v197, %v78
  %v230 = vadd.f32 %v198, %v78
  %v231 = vadd.f32 %v199, %v78
  %v232 = vadd.f32 %v200, %v78
  %v233 = vadd.f32 %v201, %v78
  %v234 = vadd.f32 %v202, %v78
  %v235 = vadd.f32 %v203, %v78
  %v236 = vadd.f32 %v204, %v78
  %v237 = vadd.f32 %v205, %v83
  %v238 = vadd.f32 %v206, %v83
  %v239 = vadd.f32 %v207, %v83
  %v240 = vadd.f32 %v208, %v83
  %v241 = vadd.f32 %v209, %v83
  %v242 = vadd.f32 %v210, %v83
  %v243 = vadd.f32 %v211, %v83
  %v244 = vadd.f32 %v212, %v83
  %v245 = vadd.f32 %v213, %v88
  %v246 = vadd.f32 %v214, %v88
  %v247 = vadd.f32 %v215, %v88
  %v248 = vadd.f32 %v216, %v88
  %v249 = vadd.f32 %v217, %v88
  %v250 = vadd.f32 %v218, %v88
  %v251 = vadd.f32 %v219, %v88
  %v252 = vadd.f32 %v220, %v88
  %v253 = vadd.f32 %v221, %v93
  %v254 = vadd.f32 %v222, %v93
  %v255 = vadd.f32 %v223, %v93
  %v256 = vadd.f32 %v224, %v93
  %v257 = vadd.f32 %v225, %v93
  %v258 = vadd.f32 %v226, %v93
  %v259 = vadd.f32 %v227, %v93
  %v260 = vadd.f32 %v228, %v93
  %v261 = vtanh.pop %v229
  %v262 = vtanh.pop %v230
  %v263 = vtanh.pop %v231
  %v264 = vtanh.pop %v232
  %v265 = vtanh.pop %v233
  %v266 = vtanh.pop %v234
  %v267 = vtanh.pop %v235
  %v268 = vtanh.pop %v236
  %v269 = vtanh.pop %v237
  %v270 = vtanh.pop %v238
  %v271 = vtanh.pop %v239
  %v272 = vtanh.pop %v240
  %v273 = vtanh.pop %v241
  %v274 = vtanh.pop %v242
  %v275 = vtanh.pop %v243
  %v276 = vtanh.pop %v244
  %v277 = vtanh.pop %v245
  %v278 = vtanh.pop %v246
  %v279 = vtanh.pop %v247
  %v280 = vtanh.pop %v248
  %v281 = vtanh.pop %v249
  %v282 = vtanh.pop %v250
  %v283 = vtanh.pop %v251
  %v284 = vtanh.pop %v252
  %v285 = vtanh.pop %v253
  %v286 = vtanh.pop %v254
  %v287 = vtanh.pop %v255
  %v288 = vtanh.pop %v256
  %v289 = vtanh.pop %v257
  %v290 = vtanh.pop %v258
  %v291 = vtanh.pop %v259
  %v292 = vtanh.pop %v260
  %v293 = vmul.f32 %v261, %v261
  %v294 = vmul.f32 %v262, %v262
  %v295 = vmul.f32 %v263, %v263
  %v296 = vmul.f32 %v264, %v264
  %v297 = vmul.f32 %v265, %v265
  %v298 = vmul.f32 %v266, %v266
  %v299 = vmul.f32 %v267, %v267
  %v300 = vmul.f32 %v268, %v268
  %v301 = vmul.f32 %v269, %v269
  %v302 = vmul.f32 %v270, %v270
  %v303 = vmul.f32 %v271, %v271
  %v304 = vmul.f32 %v272, %v272
  %v305 = vmul.f32 %v273, %v273
  %v306 = vmul.f32 %v274, %v274
  %v307 = vmul.f32 %v275, %v275
  %v308 = vmul.f32 %v276, %v276
  %v309 = vmul.f32 %v277, %v277
  %v310 = vmul.f32 %v278, %v278
  %v311 = vmul.f32 %v279, %v279
  %v312 = vmul.f32 %v280, %v280
  %v313 = vmul.f32 %v281, %v281
  %v314 = vmul.f32 %v282, %v282
  %v315 = vmul.f32 %v283, %v283
  %v316 = vmul.f32 %v284, %v284
  %v317 = vmul.f32 %v285, %v285
  %v318 = vmul.f32 %v286, %v286
  %v319 = vmul.f32 %v287, %v287
  %v320 = vmul.f32 %v288, %v288
  %v321 = vmul.f32 %v289, %v289
  %v322 = vmul.f32 %v290, %v290
  %v323 = vmul.f32 %v291, %v291
  %v324 = vmul.f32 %v292, %v292
  %v325 = vsub.f32 1.0, %v293
  %v326 = vsub.f32 1.0, %v294
  %v327 = vsub.f32 1.0, %v295
  %v328 = vsub.f32 1.0, %v296
  %v329 = vsub.f32 1.0, %v297
  %v330 = vsub.f32 1.0, %v298
  %v331 = vsub.f32 1.0, %v299
  %v332 = vsub.f32 1.0, %v300
  %v333 = vsub.f32 1.0, %v301
  %v334 = vsub.f32 1.0, %v302
  %v335 = vsub.f32 1.0, %v303
  %v336 = vsub.f32 1.0, %v304
  %v337 = vsub.f32 1.0, %v305
  %v338 = vsub.f32 1.0, %v306
  %v339 = vsub.f32 1.0, %v307
  %v340 = vsub.f32 1.0, %v308
  %v341 = vsub.f32 1.0, %v309
  %v342 = vsub.f32 1.0, %v310
  %v343 = vsub.f32 1.0, %v311
  %v344 = vsub.f32 1.0, %v312
  %v345 = vsub.f32 1.0, %v313
  %v346 = vsub.f32 1.0, %v314
  %v347 = vsub.f32 1.0, %v315
  %v348 = vsub.f32 1.0, %v316
  %v349 = vsub.f32 1.0, %v317
  %v350 = vsub.f32 1.0, %v318
  %v351 = vsub.f32 1.0, %v319
  %v352 = vsub.f32 1.0, %v320
  %v353 = vsub.f32 1.0, %v321
  %v354 = vsub.f32 1.0, %v322
  %v355 = vsub.f32 1.0, %v323
  %v356 = vsub.f32 1.0, %v324
  %v357 = vmul.f32 %v325, %v42
  %v358 = vmul.f32 %v326, %v42
  %v359 = vmul.f32 %v327, %v42
  %v360 = vmul.f32 %v328, %v42
  %v361 = vmul.f32 %v329, %v42
  %v362 = vmul.f32 %v330, %v42
  %v363 = vmul.f32 %v331, %v42
  %v364 = vmul.f32 %v332, %v42
  %v365 = vmul.f32 %v333, %v47
  %v366 = vmul.f32 %v334, %v47
  %v367 = vmul.f32 %v335, %v47
  %v368 = vmul.f32 %v336, %v47
  %v369 = vmul.f32 %v337, %v47
  %v370 = vmul.f32 %v338, %v47
  %v371 = vmul.f32 %v339, %v47
  %v372 = vmul.f32 %v340, %v47
  %v373 = vmul.f32 %v341, %v52
  %v374 = vmul.f32 %v342, %v52
  %v375 = vmul.f32 %v343, %v52
  %v376 = vmul.f32 %v344, %v52
  %v377 = vmul.f32 %v345, %v52
  %v378 = vmul.f32 %v346, %v52
  %v379 = vmul.f32 %v347, %v52
  %v380 = vmul.f32 %v348, %v52
  %v381 = vmul.f32 %v349, %v57
  %v382 = vmul.f32 %v350, %v57
  %v383 = vmul.f32 %v351, %v57
  %v384 = vmul.f32 %v352, %v57
  %v385 = vmul.f32 %v353, %v57
  %v386 = vmul.f32 %v354, %v57
  %v387 = vmul.f32 %v355, %v57
  %v388 = vmul.f32 %v356, %v57
  %v389 = vmul.f32 %v325, %v61
  %v390 = vmul.f32 %v326, %v61
  %v391 = vmul.f32 %v327, %v61
  %v392 = vmul.f32 %v328, %v61
  %v393 = vmul.f32 %v329, %v61
  %v394 = vmul.f32 %v330, %v61
  %v395 = vmul.f32 %v331, %v61
  %v396 = vmul.f32 %v332, %v61
  %v397 = vmul.f32 %v333, %v65
  %v398 = vmul.f32 %v334, %v65
  %v399 = vmul.f32 %v335, %v65
  %v400 = vmul.f32 %v336, %v65
  %v401 = vmul.f32 %v337, %v65
  %v402 = vmul.f32 %v338, %v65
  %v403 = vmul.f32 %v339, %v65
  %v404 = vmul.f32 %v340, %v65
  %v405 = vmul.f32 %v341, %v69
  %v406 = vmul.f32 %v342, %v69
  %v407 = vmul.f32 %v343, %v69
  %v408 = vmul.f32 %v344, %v69
  %v409 = vmul.f32 %v345, %v69
  %v410 = vmul.f32 %v346, %v69
  %v411 = vmul.f32 %v347, %v69
  %v412 = vmul.f32 %v348, %v69
  %v413 = vmul.f32 %v349, %v73
  %v414 = vmul.f32 %v350, %v73
  %v415 = vmul.f32 %v351, %v73
  %v416 = vmul.f32 %v352, %v73
  %v417 = vmul.f32 %v353, %v73
  %v418 = vmul.f32 %v354, %v73
  %v419 = vmul.f32 %v355, %v73
  %v420 = vmul.f32 %v356, %v73
  %v421 = vmul.f32 %v261, %v389
  %v422 = vmul.f32 %v262, %v390
  %v423 = vmul.f32 %v263, %v391
  %v424 = vmul.f32 %v264, %v392
  %v425 = vmul.f32 %v265, %v393
  %v426 = vmul.f32 %v266, %v394
  %v427 = vmul.f32 %v267, %v395
  %v428 = vmul.f32 %v268, %v396
  %v429 = vmul.f32 %v269, %v397
  %v430 = vmul.f32 %v270, %v398
  %v431 = vmul.f32 %v271, %v399
  %v432 = vmul.f32 %v272, %v400
  %v433 = vmul.f32 %v273, %v401
  %v434 = vmul.f32 %v274, %v402
  %v435 = vmul.f32 %v275, %v403
  %v436 = vmul.f32 %v276, %v404
  %v437 = vmul.f32 %v277, %v405
  %v438 = vmul.f32 %v278, %v406
  %v439 = vmul.f32 %v279, %v407
  %v440 = vmul.f32 %v280, %v408
  %v441 = vmul.f32 %v281, %v409
  %v442 = vmul.f32 %v282, %v410
  %v443 = vmul.f32 %v283, %v411
  %v444 = vmul.f32 %v284, %v412
  %v445 = vmul.f32 %v285, %v413
  %v446 = vmul.f32 %v286, %v414
  %v447 = vmul.f32 %v287, %v415
  %v448 = vmul.f32 %v288, %v416
  %v449 = vmul.f32 %v289, %v417
  %v450 = vmul.f32 %v290, %v418
  %v451 = vmul.f32 %v291, %v419
  %v452 = vmul.f32 %v292, %v420
  %v453 = vmul.f32 %v95, %v421
  %v454 = vmul.f32 %v95, %v422
  %v455 = vmul.f32 %v95, %v423
  %v456 = vmul.f32 %v95, %v424
  %v457 = vmul.f32 %v95, %v425
  %v458 = vmul.f32 %v95, %v426
  %v459 = vmul.f32 %v95, %v427
  %v460 = vmul.f32 %v95, %v428
  %v461 = vmul.f32 %v96, %v429
  %v462 = vmul.f32 %v96, %v430
  %v463 = vmul.f32 %v96, %v431
  %v464 = vmul.f32 %v96, %v432
  %v465 = vmul.f32 %v96, %v433
  %v466 = vmul.f32 %v96, %v434
  %v467 = vmul.f32 %v96, %v435
  %v468 = vmul.f32 %v96, %v436
  %v469 = vmul.f32 %v97, %v437
  %v470 = vmul.f32 %v97, %v438
  %v471 = vmul.f32 %v97, %v439
  %v472 = vmul.f32 %v97, %v440
  %v473 = vmul.f32 %v97, %v441
  %v474 = vmul.f32 %v97, %v442
  %v475 = vmul.f32 %v97, %v443
  %v476 = vmul.f32 %v97, %v444
  %v477 = vmul.f32 %v98, %v445
  %v478 = vmul.f32 %v98, %v446
  %v479 = vmul.f32 %v98, %v447
  %v480 = vmul.f32 %v98, %v448
  %v481 = vmul.f32 %v98, %v449
  %v482 = vmul.f32 %v98, %v450
  %v483 = vmul.f32 %v98, %v451
  %v484 = vmul.f32 %v98, %v452
  %v485 = vld [vmem:[%s3] sm:$0xff]
  %v486 = vld [vmem:[%s3 + $0x8] sm:$0xff]
  %v487 = vld [vmem:[%s3 + $0x10] sm:$0xff]
  %v488 = vld [vmem:[%s3 + $0x18] sm:$0xff]
  %v489 = vld [vmem:[%s4] sm:$0xff]
  %v490 = vld [vmem:[%s4 + $0x8] sm:$0xff]
  %v491 = vld [vmem:[%s4 + $0x10] sm:$0xff]
  %v492 = vld [vmem:[%s4 + $0x18] sm:$0xff]
  %494 = vset.pattern.permute.xlu0 0
  %495 = vperm.xlu0 %494, %v489
  %v496 = vpop.permute.xlu0 %495
  %499 = vset.pattern.permute.xlu0 0
  %500 = vperm.xlu0 %499, %v490
  %v501 = vpop.permute.xlu0 %500
  %504 = vset.pattern.permute.xlu0 0
  %505 = vperm.xlu0 %504, %v491
  %v506 = vpop.permute.xlu0 %505
  %509 = vset.pattern.permute.xlu0 0
  %510 = vperm.xlu0 %509, %v492
  %v511 = vpop.permute.xlu0 %510
  %vm513 = vcmask 261120
  %v515 = vsel %vm513, %v485, 0
  %v518 = vsel %vm513, %v486, 0
  %v521 = vsel %vm513, %v487, 0
  %v524 = vsel %vm513, %v488, 0
  %526 = vmatpush.msra.mxu0 0.0
  %527 = vmatpush.msra.mxu0 0.0
  %528 = vmatpush.msra.mxu0 0.0
  %529 = vmatpush.msra.mxu0 0.0
  %530 = vmatpush.msra.mxu0 0.0
  %531 = vmatpush.msra.mxu0 0.0
  %532 = vmatpush.msra.mxu0 0.0
  %533 = vmatpush.msra.mxu0 0.0
  %534 = vmatpush.msra.mxu0 0.0
  %535 = vmatpush.msra.mxu0 0.0
  %536 = vmatpush.msra.mxu0 0.0
  %537 = vmatpush.msra.mxu0 0.0
  %538 = vmatpush.msra.mxu0 %v285
  %539 = vmatpush.msra.mxu0 %v277
  %540 = vmatpush.msra.mxu0 %v269
  %541 = vmatpush.msra.mxu0 %v261
  %542 = vmatmul.f32.gmra.mxu0 %v515
  %v543 = vpop.f32.mrf.mxu0
  %v544 = vadd.f32 %v496, %v543
  %545 = vmatmul.f32.gmra.mxu0 %v518
  %v546 = vpop.f32.mrf.mxu0
  %v547 = vadd.f32 %v501, %v546
  %548 = vmatmul.f32.gmra.mxu0 %v521
  %v549 = vpop.f32.mrf.mxu0
  %v550 = vadd.f32 %v506, %v549
  %551 = vmatmul.f32.gmra.mxu0 %v524
  %v552 = vpop.f32.mrf.mxu0
  %v553 = vadd.f32 %v511, %v552
  %554 = vdwg.mxu0
  %555 = vmatpush.msra.mxu0 0.0
  %556 = vmatpush.msra.mxu0 0.0
  %557 = vmatpush.msra.mxu0 0.0
  %558 = vmatpush.msra.mxu0 0.0
  %559 = vmatpush.msra.mxu0 0.0
  %560 = vmatpush.msra.mxu0 0.0
  %561 = vmatpush.msra.mxu0 0.0
  %562 = vmatpush.msra.mxu0 0.0
  %563 = vmatpush.msra.mxu0 0.0
  %564 = vmatpush.msra.mxu0 0.0
  %565 = vmatpush.msra.mxu0 0.0
  %566 = vmatpush.msra.mxu0 0.0
  %567 = vmatpush.msra.mxu0 %v286
  %568 = vmatpush.msra.mxu0 %v278
  %569 = vmatpush.msra.mxu0 %v270
  %570 = vmatpush.msra.mxu0 %v262
  %571 = vmatmul.f32.gmra.mxu0 %v515
  %v572 = vpop.f32.mrf.mxu0
  %v573 = vadd.f32 %v496, %v572
  %574 = vmatmul.f32.gmra.mxu0 %v518
  %v575 = vpop.f32.mrf.mxu0
  %v576 = vadd.f32 %v501, %v575
  %577 = vmatmul.f32.gmra.mxu0 %v521
  %v578 = vpop.f32.mrf.mxu0
  %v579 = vadd.f32 %v506, %v578
  %580 = vmatmul.f32.gmra.mxu0 %v524
  %v581 = vpop.f32.mrf.mxu0
  %v582 = vadd.f32 %v511, %v581
  %583 = vdwg.mxu0
  %584 = vmatpush.msra.mxu0 0.0
  %585 = vmatpush.msra.mxu0 0.0
  %586 = vmatpush.msra.mxu0 0.0
  %587 = vmatpush.msra.mxu0 0.0
  %588 = vmatpush.msra.mxu0 0.0
  %589 = vmatpush.msra.mxu0 0.0
  %590 = vmatpush.msra.mxu0 0.0
  %591 = vmatpush.msra.mxu0 0.0
  %592 = vmatpush.msra.mxu0 0.0
  %593 = vmatpush.msra.mxu0 0.0
  %594 = vmatpush.msra.mxu0 0.0
  %595 = vmatpush.msra.mxu0 0.0
  %596 = vmatpush.msra.mxu0 %v287
  %597 = vmatpush.msra.mxu0 %v279
  %598 = vmatpush.msra.mxu0 %v271
  %599 = vmatpush.msra.mxu0 %v263
  %600 = vmatmul.f32.gmra.mxu0 %v515
  %v601 = vpop.f32.mrf.mxu0
  %v602 = vadd.f32 %v496, %v601
  %603 = vmatmul.f32.gmra.mxu0 %v518
  %v604 = vpop.f32.mrf.mxu0
  %v605 = vadd.f32 %v501, %v604
  %606 = vmatmul.f32.gmra.mxu0 %v521
  %v607 = vpop.f32.mrf.mxu0
  %v608 = vadd.f32 %v506, %v607
  %609 = vmatmul.f32.gmra.mxu0 %v524
  %v610 = vpop.f32.mrf.mxu0
  %v611 = vadd.f32 %v511, %v610
  %612 = vdwg.mxu0
  %613 = vmatpush.msra.mxu0 0.0
  %614 = vmatpush.msra.mxu0 0.0
  %615 = vmatpush.msra.mxu0 0.0
  %616 = vmatpush.msra.mxu0 0.0
  %617 = vmatpush.msra.mxu0 0.0
  %618 = vmatpush.msra.mxu0 0.0
  %619 = vmatpush.msra.mxu0 0.0
  %620 = vmatpush.msra.mxu0 0.0
  %621 = vmatpush.msra.mxu0 0.0
  %622 = vmatpush.msra.mxu0 0.0
  %623 = vmatpush.msra.mxu0 0.0
  %624 = vmatpush.msra.mxu0 0.0
  %625 = vmatpush.msra.mxu0 %v288
  %626 = vmatpush.msra.mxu0 %v280
  %627 = vmatpush.msra.mxu0 %v272
  %628 = vmatpush.msra.mxu0 %v264
  %629 = vmatmul.f32.gmra.mxu0 %v515
  %v630 = vpop.f32.mrf.mxu0
  %v631 = vadd.f32 %v496, %v630
  %632 = vmatmul.f32.gmra.mxu0 %v518
  %v633 = vpop.f32.mrf.mxu0
  %v634 = vadd.f32 %v501, %v633
  %635 = vmatmul.f32.gmra.mxu0 %v521
  %v636 = vpop.f32.mrf.mxu0
  %v637 = vadd.f32 %v506, %v636
  %638 = vmatmul.f32.gmra.mxu0 %v524
  %v639 = vpop.f32.mrf.mxu0
  %v640 = vadd.f32 %v511, %v639
  %641 = vdwg.mxu0
  %642 = vmatpush.msra.mxu0 0.0
  %643 = vmatpush.msra.mxu0 0.0
  %644 = vmatpush.msra.mxu0 0.0
  %645 = vmatpush.msra.mxu0 0.0
  %646 = vmatpush.msra.mxu0 0.0
  %647 = vmatpush.msra.mxu0 0.0
  %648 = vmatpush.msra.mxu0 0.0
  %649 = vmatpush.msra.mxu0 0.0
  %650 = vmatpush.msra.mxu0 0.0
  %651 = vmatpush.msra.mxu0 0.0
  %652 = vmatpush.msra.mxu0 0.0
  %653 = vmatpush.msra.mxu0 0.0
  %654 = vmatpush.msra.mxu0 %v289
  %655 = vmatpush.msra.mxu0 %v281
  %656 = vmatpush.msra.mxu0 %v273
  %657 = vmatpush.msra.mxu0 %v265
  %658 = vmatmul.f32.gmra.mxu0 %v515
  %v659 = vpop.f32.mrf.mxu0
  %v660 = vadd.f32 %v496, %v659
  %661 = vmatmul.f32.gmra.mxu0 %v518
  %v662 = vpop.f32.mrf.mxu0
  %v663 = vadd.f32 %v501, %v662
  %664 = vmatmul.f32.gmra.mxu0 %v521
  %v665 = vpop.f32.mrf.mxu0
  %v666 = vadd.f32 %v506, %v665
  %667 = vmatmul.f32.gmra.mxu0 %v524
  %v668 = vpop.f32.mrf.mxu0
  %v669 = vadd.f32 %v511, %v668
  %670 = vdwg.mxu0
  %671 = vmatpush.msra.mxu0 0.0
  %672 = vmatpush.msra.mxu0 0.0
  %673 = vmatpush.msra.mxu0 0.0
  %674 = vmatpush.msra.mxu0 0.0
  %675 = vmatpush.msra.mxu0 0.0
  %676 = vmatpush.msra.mxu0 0.0
  %677 = vmatpush.msra.mxu0 0.0
  %678 = vmatpush.msra.mxu0 0.0
  %679 = vmatpush.msra.mxu0 0.0
  %680 = vmatpush.msra.mxu0 0.0
  %681 = vmatpush.msra.mxu0 0.0
  %682 = vmatpush.msra.mxu0 0.0
  %683 = vmatpush.msra.mxu0 %v290
  %684 = vmatpush.msra.mxu0 %v282
  %685 = vmatpush.msra.mxu0 %v274
  %686 = vmatpush.msra.mxu0 %v266
  %687 = vmatmul.f32.gmra.mxu0 %v515
  %v688 = vpop.f32.mrf.mxu0
  %v689 = vadd.f32 %v496, %v688
  %690 = vmatmul.f32.gmra.mxu0 %v518
  %v691 = vpop.f32.mrf.mxu0
  %v692 = vadd.f32 %v501, %v691
  %693 = vmatmul.f32.gmra.mxu0 %v521
  %v694 = vpop.f32.mrf.mxu0
  %v695 = vadd.f32 %v506, %v694
  %696 = vmatmul.f32.gmra.mxu0 %v524
  %v697 = vpop.f32.mrf.mxu0
  %v698 = vadd.f32 %v511, %v697
  %699 = vdwg.mxu0
  %700 = vmatpush.msra.mxu0 0.0
  %701 = vmatpush.msra.mxu0 0.0
  %702 = vmatpush.msra.mxu0 0.0
  %703 = vmatpush.msra.mxu0 0.0
  %704 = vmatpush.msra.mxu0 0.0
  %705 = vmatpush.msra.mxu0 0.0
  %706 = vmatpush.msra.mxu0 0.0
  %707 = vmatpush.msra.mxu0 0.0
  %708 = vmatpush.msra.mxu0 0.0
  %709 = vmatpush.msra.mxu0 0.0
  %710 = vmatpush.msra.mxu0 0.0
  %711 = vmatpush.msra.mxu0 0.0
  %712 = vmatpush.msra.mxu0 %v291
  %713 = vmatpush.msra.mxu0 %v283
  %714 = vmatpush.msra.mxu0 %v275
  %715 = vmatpush.msra.mxu0 %v267
  %716 = vmatmul.f32.gmra.mxu0 %v515
  %v717 = vpop.f32.mrf.mxu0
  %v718 = vadd.f32 %v496, %v717
  %719 = vmatmul.f32.gmra.mxu0 %v518
  %v720 = vpop.f32.mrf.mxu0
  %v721 = vadd.f32 %v501, %v720
  %722 = vmatmul.f32.gmra.mxu0 %v521
  %v723 = vpop.f32.mrf.mxu0
  %v724 = vadd.f32 %v506, %v723
  %725 = vmatmul.f32.gmra.mxu0 %v524
  %v726 = vpop.f32.mrf.mxu0
  %v727 = vadd.f32 %v511, %v726
  %728 = vdwg.mxu0
  %729 = vmatpush.msra.mxu0 0.0
  %730 = vmatpush.msra.mxu0 0.0
  %731 = vmatpush.msra.mxu0 0.0
  %732 = vmatpush.msra.mxu0 0.0
  %733 = vmatpush.msra.mxu0 0.0
  %734 = vmatpush.msra.mxu0 0.0
  %735 = vmatpush.msra.mxu0 0.0
  %736 = vmatpush.msra.mxu0 0.0
  %737 = vmatpush.msra.mxu0 0.0
  %738 = vmatpush.msra.mxu0 0.0
  %739 = vmatpush.msra.mxu0 0.0
  %740 = vmatpush.msra.mxu0 0.0
  %741 = vmatpush.msra.mxu0 %v292
  %742 = vmatpush.msra.mxu0 %v284
  %743 = vmatpush.msra.mxu0 %v276
  %744 = vmatpush.msra.mxu0 %v268
  %745 = vmatmul.f32.gmra.mxu0 %v515
  %v746 = vpop.f32.mrf.mxu0
  %v747 = vadd.f32 %v496, %v746
  %748 = vmatmul.f32.gmra.mxu0 %v518
  %v749 = vpop.f32.mrf.mxu0
  %v750 = vadd.f32 %v501, %v749
  %751 = vmatmul.f32.gmra.mxu0 %v521
  %v752 = vpop.f32.mrf.mxu0
  %v753 = vadd.f32 %v506, %v752
  %754 = vmatmul.f32.gmra.mxu0 %v524
  %v755 = vpop.f32.mrf.mxu0
  %v756 = vadd.f32 %v511, %v755
  %757 = vdwg.mxu0
  %758 = vmatpush.msra.mxu0 0.0
  %759 = vmatpush.msra.mxu0 0.0
  %760 = vmatpush.msra.mxu0 0.0
  %761 = vmatpush.msra.mxu0 0.0
  %762 = vmatpush.msra.mxu0 0.0
  %763 = vmatpush.msra.mxu0 0.0
  %764 = vmatpush.msra.mxu0 0.0
  %765 = vmatpush.msra.mxu0 0.0
  %766 = vmatpush.msra.mxu0 0.0
  %767 = vmatpush.msra.mxu0 0.0
  %768 = vmatpush.msra.mxu0 0.0
  %769 = vmatpush.msra.mxu0 0.0
  %770 = vmatpush.msra.mxu0 %v381
  %771 = vmatpush.msra.mxu0 %v373
  %772 = vmatpush.msra.mxu0 %v365
  %773 = vmatpush.msra.mxu0 %v357
  %774 = vmatmul.f32.gmra.mxu0 %v515
  %v775 = vpop.f32.mrf.mxu0
  %v776 = vadd.f32 0.0, %v775
  %777 = vmatmul.f32.gmra.mxu0 %v518
  %v778 = vpop.f32.mrf.mxu0
  %v779 = vadd.f32 0.0, %v778
  %780 = vmatmul.f32.gmra.mxu0 %v521
  %v781 = vpop.f32.mrf.mxu0
  %v782 = vadd.f32 0.0, %v781
  %783 = vmatmul.f32.gmra.mxu0 %v524
  %v784 = vpop.f32.mrf.mxu0
  %v785 = vadd.f32 0.0, %v784
  %786 = vdwg.mxu0
  %787 = vmatpush.msra.mxu0 0.0
  %788 = vmatpush.msra.mxu0 0.0
  %789 = vmatpush.msra.mxu0 0.0
  %790 = vmatpush.msra.mxu0 0.0
  %791 = vmatpush.msra.mxu0 0.0
  %792 = vmatpush.msra.mxu0 0.0
  %793 = vmatpush.msra.mxu0 0.0
  %794 = vmatpush.msra.mxu0 0.0
  %795 = vmatpush.msra.mxu0 0.0
  %796 = vmatpush.msra.mxu0 0.0
  %797 = vmatpush.msra.mxu0 0.0
  %798 = vmatpush.msra.mxu0 0.0
  %799 = vmatpush.msra.mxu0 %v382
  %800 = vmatpush.msra.mxu0 %v374
  %801 = vmatpush.msra.mxu0 %v366
  %802 = vmatpush.msra.mxu0 %v358
  %803 = vmatmul.f32.gmra.mxu0 %v515
  %v804 = vpop.f32.mrf.mxu0
  %v805 = vadd.f32 0.0, %v804
  %806 = vmatmul.f32.gmra.mxu0 %v518
  %v807 = vpop.f32.mrf.mxu0
  %v808 = vadd.f32 0.0, %v807
  %809 = vmatmul.f32.gmra.mxu0 %v521
  %v810 = vpop.f32.mrf.mxu0
  %v811 = vadd.f32 0.0, %v810
  %812 = vmatmul.f32.gmra.mxu0 %v524
  %v813 = vpop.f32.mrf.mxu0
  %v814 = vadd.f32 0.0, %v813
  %815 = vdwg.mxu0
  %816 = vmatpush.msra.mxu0 0.0
  %817 = vmatpush.msra.mxu0 0.0
  %818 = vmatpush.msra.mxu0 0.0
  %819 = vmatpush.msra.mxu0 0.0
  %820 = vmatpush.msra.mxu0 0.0
  %821 = vmatpush.msra.mxu0 0.0
  %822 = vmatpush.msra.mxu0 0.0
  %823 = vmatpush.msra.mxu0 0.0
  %824 = vmatpush.msra.mxu0 0.0
  %825 = vmatpush.msra.mxu0 0.0
  %826 = vmatpush.msra.mxu0 0.0
  %827 = vmatpush.msra.mxu0 0.0
  %828 = vmatpush.msra.mxu0 %v383
  %829 = vmatpush.msra.mxu0 %v375
  %830 = vmatpush.msra.mxu0 %v367
  %831 = vmatpush.msra.mxu0 %v359
  %832 = vmatmul.f32.gmra.mxu0 %v515
  %v833 = vpop.f32.mrf.mxu0
  %v834 = vadd.f32 0.0, %v833
  %835 = vmatmul.f32.gmra.mxu0 %v518
  %v836 = vpop.f32.mrf.mxu0
  %v837 = vadd.f32 0.0, %v836
  %838 = vmatmul.f32.gmra.mxu0 %v521
  %v839 = vpop.f32.mrf.mxu0
  %v840 = vadd.f32 0.0, %v839
  %841 = vmatmul.f32.gmra.mxu0 %v524
  %v842 = vpop.f32.mrf.mxu0
  %v843 = vadd.f32 0.0, %v842
  %844 = vdwg.mxu0
  %845 = vmatpush.msra.mxu0 0.0
  %846 = vmatpush.msra.mxu0 0.0
  %847 = vmatpush.msra.mxu0 0.0
  %848 = vmatpush.msra.mxu0 0.0
  %849 = vmatpush.msra.mxu0 0.0
  %850 = vmatpush.msra.mxu0 0.0
  %851 = vmatpush.msra.mxu0 0.0
  %852 = vmatpush.msra.mxu0 0.0
  %853 = vmatpush.msra.mxu0 0.0
  %854 = vmatpush.msra.mxu0 0.0
  %855 = vmatpush.msra.mxu0 0.0
  %856 = vmatpush.msra.mxu0 0.0
  %857 = vmatpush.msra.mxu0 %v384
  %858 = vmatpush.msra.mxu0 %v376
  %859 = vmatpush.msra.mxu0 %v368
  %860 = vmatpush.msra.mxu0 %v360
  %861 = vmatmul.f32.gmra.mxu0 %v515
  %v862 = vpop.f32.mrf.mxu0
  %v863 = vadd.f32 0.0, %v862
  %864 = vmatmul.f32.gmra.mxu0 %v518
  %v865 = vpop.f32.mrf.mxu0
  %v866 = vadd.f32 0.0, %v865
  %867 = vmatmul.f32.gmra.mxu0 %v521
  %v868 = vpop.f32.mrf.mxu0
  %v869 = vadd.f32 0.0, %v868
  %870 = vmatmul.f32.gmra.mxu0 %v524
  %v871 = vpop.f32.mrf.mxu0
  %v872 = vadd.f32 0.0, %v871
  %873 = vdwg.mxu0
  %874 = vmatpush.msra.mxu0 0.0
  %875 = vmatpush.msra.mxu0 0.0
  %876 = vmatpush.msra.mxu0 0.0
  %877 = vmatpush.msra.mxu0 0.0
  %878 = vmatpush.msra.mxu0 0.0
  %879 = vmatpush.msra.mxu0 0.0
  %880 = vmatpush.msra.mxu0 0.0
  %881 = vmatpush.msra.mxu0 0.0
  %882 = vmatpush.msra.mxu0 0.0
  %883 = vmatpush.msra.mxu0 0.0
  %884 = vmatpush.msra.mxu0 0.0
  %885 = vmatpush.msra.mxu0 0.0
  %886 = vmatpush.msra.mxu0 %v385
  %887 = vmatpush.msra.mxu0 %v377
  %888 = vmatpush.msra.mxu0 %v369
  %889 = vmatpush.msra.mxu0 %v361
  %890 = vmatmul.f32.gmra.mxu0 %v515
  %v891 = vpop.f32.mrf.mxu0
  %v892 = vadd.f32 0.0, %v891
  %893 = vmatmul.f32.gmra.mxu0 %v518
  %v894 = vpop.f32.mrf.mxu0
  %v895 = vadd.f32 0.0, %v894
  %896 = vmatmul.f32.gmra.mxu0 %v521
  %v897 = vpop.f32.mrf.mxu0
  %v898 = vadd.f32 0.0, %v897
  %899 = vmatmul.f32.gmra.mxu0 %v524
  %v900 = vpop.f32.mrf.mxu0
  %v901 = vadd.f32 0.0, %v900
  %902 = vdwg.mxu0
  %903 = vmatpush.msra.mxu0 0.0
  %904 = vmatpush.msra.mxu0 0.0
  %905 = vmatpush.msra.mxu0 0.0
  %906 = vmatpush.msra.mxu0 0.0
  %907 = vmatpush.msra.mxu0 0.0
  %908 = vmatpush.msra.mxu0 0.0
  %909 = vmatpush.msra.mxu0 0.0
  %910 = vmatpush.msra.mxu0 0.0
  %911 = vmatpush.msra.mxu0 0.0
  %912 = vmatpush.msra.mxu0 0.0
  %913 = vmatpush.msra.mxu0 0.0
  %914 = vmatpush.msra.mxu0 0.0
  %915 = vmatpush.msra.mxu0 %v386
  %916 = vmatpush.msra.mxu0 %v378
  %917 = vmatpush.msra.mxu0 %v370
  %918 = vmatpush.msra.mxu0 %v362
  %919 = vmatmul.f32.gmra.mxu0 %v515
  %v920 = vpop.f32.mrf.mxu0
  %v921 = vadd.f32 0.0, %v920
  %922 = vmatmul.f32.gmra.mxu0 %v518
  %v923 = vpop.f32.mrf.mxu0
  %v924 = vadd.f32 0.0, %v923
  %925 = vmatmul.f32.gmra.mxu0 %v521
  %v926 = vpop.f32.mrf.mxu0
  %v927 = vadd.f32 0.0, %v926
  %928 = vmatmul.f32.gmra.mxu0 %v524
  %v929 = vpop.f32.mrf.mxu0
  %v930 = vadd.f32 0.0, %v929
  %931 = vdwg.mxu0
  %932 = vmatpush.msra.mxu0 0.0
  %933 = vmatpush.msra.mxu0 0.0
  %934 = vmatpush.msra.mxu0 0.0
  %935 = vmatpush.msra.mxu0 0.0
  %936 = vmatpush.msra.mxu0 0.0
  %937 = vmatpush.msra.mxu0 0.0
  %938 = vmatpush.msra.mxu0 0.0
  %939 = vmatpush.msra.mxu0 0.0
  %940 = vmatpush.msra.mxu0 0.0
  %941 = vmatpush.msra.mxu0 0.0
  %942 = vmatpush.msra.mxu0 0.0
  %943 = vmatpush.msra.mxu0 0.0
  %944 = vmatpush.msra.mxu0 %v387
  %945 = vmatpush.msra.mxu0 %v379
  %946 = vmatpush.msra.mxu0 %v371
  %947 = vmatpush.msra.mxu0 %v363
  %948 = vmatmul.f32.gmra.mxu0 %v515
  %v949 = vpop.f32.mrf.mxu0
  %v950 = vadd.f32 0.0, %v949
  %951 = vmatmul.f32.gmra.mxu0 %v518
  %v952 = vpop.f32.mrf.mxu0
  %v953 = vadd.f32 0.0, %v952
  %954 = vmatmul.f32.gmra.mxu0 %v521
  %v955 = vpop.f32.mrf.mxu0
  %v956 = vadd.f32 0.0, %v955
  %957 = vmatmul.f32.gmra.mxu0 %v524
  %v958 = vpop.f32.mrf.mxu0
  %v959 = vadd.f32 0.0, %v958
  %960 = vdwg.mxu0
  %961 = vmatpush.msra.mxu0 0.0
  %962 = vmatpush.msra.mxu0 0.0
  %963 = vmatpush.msra.mxu0 0.0
  %964 = vmatpush.msra.mxu0 0.0
  %965 = vmatpush.msra.mxu0 0.0
  %966 = vmatpush.msra.mxu0 0.0
  %967 = vmatpush.msra.mxu0 0.0
  %968 = vmatpush.msra.mxu0 0.0
  %969 = vmatpush.msra.mxu0 0.0
  %970 = vmatpush.msra.mxu0 0.0
  %971 = vmatpush.msra.mxu0 0.0
  %972 = vmatpush.msra.mxu0 0.0
  %973 = vmatpush.msra.mxu0 %v388
  %974 = vmatpush.msra.mxu0 %v380
  %975 = vmatpush.msra.mxu0 %v372
  %976 = vmatpush.msra.mxu0 %v364
  %977 = vmatmul.f32.gmra.mxu0 %v515
  %v978 = vpop.f32.mrf.mxu0
  %v979 = vadd.f32 0.0, %v978
  %980 = vmatmul.f32.gmra.mxu0 %v518
  %v981 = vpop.f32.mrf.mxu0
  %v982 = vadd.f32 0.0, %v981
  %983 = vmatmul.f32.gmra.mxu0 %v521
  %v984 = vpop.f32.mrf.mxu0
  %v985 = vadd.f32 0.0, %v984
  %986 = vmatmul.f32.gmra.mxu0 %v524
  %v987 = vpop.f32.mrf.mxu0
  %v988 = vadd.f32 0.0, %v987
  %989 = vdwg.mxu0
  %990 = vmatpush.msra.mxu0 0.0
  %991 = vmatpush.msra.mxu0 0.0
  %992 = vmatpush.msra.mxu0 0.0
  %993 = vmatpush.msra.mxu0 0.0
  %994 = vmatpush.msra.mxu0 0.0
  %995 = vmatpush.msra.mxu0 0.0
  %996 = vmatpush.msra.mxu0 0.0
  %997 = vmatpush.msra.mxu0 0.0
  %998 = vmatpush.msra.mxu0 0.0
  %999 = vmatpush.msra.mxu0 0.0
  %1000 = vmatpush.msra.mxu0 0.0
  %1001 = vmatpush.msra.mxu0 0.0
  %1002 = vmatpush.msra.mxu0 %v413
  %1003 = vmatpush.msra.mxu0 %v405
  %1004 = vmatpush.msra.mxu0 %v397
  %1005 = vmatpush.msra.mxu0 %v389
  %1006 = vmatmul.f32.gmra.mxu0 %v515
  %v1007 = vpop.f32.mrf.mxu0
  %v1008 = vadd.f32 0.0, %v1007
  %1009 = vmatmul.f32.gmra.mxu0 %v518
  %v1010 = vpop.f32.mrf.mxu0
  %v1011 = vadd.f32 0.0, %v1010
  %1012 = vmatmul.f32.gmra.mxu0 %v521
  %v1013 = vpop.f32.mrf.mxu0
  %v1014 = vadd.f32 0.0, %v1013
  %1015 = vmatmul.f32.gmra.mxu0 %v524
  %v1016 = vpop.f32.mrf.mxu0
  %v1017 = vadd.f32 0.0, %v1016
  %1018 = vdwg.mxu0
  %1019 = vmatpush.msra.mxu0 0.0
  %1020 = vmatpush.msra.mxu0 0.0
  %1021 = vmatpush.msra.mxu0 0.0
  %1022 = vmatpush.msra.mxu0 0.0
  %1023 = vmatpush.msra.mxu0 0.0
  %1024 = vmatpush.msra.mxu0 0.0
  %1025 = vmatpush.msra.mxu0 0.0
  %1026 = vmatpush.msra.mxu0 0.0
  %1027 = vmatpush.msra.mxu0 0.0
  %1028 = vmatpush.msra.mxu0 0.0
  %1029 = vmatpush.msra.mxu0 0.0
  %1030 = vmatpush.msra.mxu0 0.0
  %1031 = vmatpush.msra.mxu0 %v414
  %1032 = vmatpush.msra.mxu0 %v406
  %1033 = vmatpush.msra.mxu0 %v398
  %1034 = vmatpush.msra.mxu0 %v390
  %1035 = vmatmul.f32.gmra.mxu0 %v515
  %v1036 = vpop.f32.mrf.mxu0
  %v1037 = vadd.f32 0.0, %v1036
  %1038 = vmatmul.f32.gmra.mxu0 %v518
  %v1039 = vpop.f32.mrf.mxu0
  %v1040 = vadd.f32 0.0, %v1039
  %1041 = vmatmul.f32.gmra.mxu0 %v521
  %v1042 = vpop.f32.mrf.mxu0
  %v1043 = vadd.f32 0.0, %v1042
  %1044 = vmatmul.f32.gmra.mxu0 %v524
  %v1045 = vpop.f32.mrf.mxu0
  %v1046 = vadd.f32 0.0, %v1045
  %1047 = vdwg.mxu0
  %1048 = vmatpush.msra.mxu0 0.0
  %1049 = vmatpush.msra.mxu0 0.0
  %1050 = vmatpush.msra.mxu0 0.0
  %1051 = vmatpush.msra.mxu0 0.0
  %1052 = vmatpush.msra.mxu0 0.0
  %1053 = vmatpush.msra.mxu0 0.0
  %1054 = vmatpush.msra.mxu0 0.0
  %1055 = vmatpush.msra.mxu0 0.0
  %1056 = vmatpush.msra.mxu0 0.0
  %1057 = vmatpush.msra.mxu0 0.0
  %1058 = vmatpush.msra.mxu0 0.0
  %1059 = vmatpush.msra.mxu0 0.0
  %1060 = vmatpush.msra.mxu0 %v415
  %1061 = vmatpush.msra.mxu0 %v407
  %1062 = vmatpush.msra.mxu0 %v399
  %1063 = vmatpush.msra.mxu0 %v391
  %1064 = vmatmul.f32.gmra.mxu0 %v515
  %v1065 = vpop.f32.mrf.mxu0
  %v1066 = vadd.f32 0.0, %v1065
  %1067 = vmatmul.f32.gmra.mxu0 %v518
  %v1068 = vpop.f32.mrf.mxu0
  %v1069 = vadd.f32 0.0, %v1068
  %1070 = vmatmul.f32.gmra.mxu0 %v521
  %v1071 = vpop.f32.mrf.mxu0
  %v1072 = vadd.f32 0.0, %v1071
  %1073 = vmatmul.f32.gmra.mxu0 %v524
  %v1074 = vpop.f32.mrf.mxu0
  %v1075 = vadd.f32 0.0, %v1074
  %1076 = vdwg.mxu0
  %1077 = vmatpush.msra.mxu0 0.0
  %1078 = vmatpush.msra.mxu0 0.0
  %1079 = vmatpush.msra.mxu0 0.0
  %1080 = vmatpush.msra.mxu0 0.0
  %1081 = vmatpush.msra.mxu0 0.0
  %1082 = vmatpush.msra.mxu0 0.0
  %1083 = vmatpush.msra.mxu0 0.0
  %1084 = vmatpush.msra.mxu0 0.0
  %1085 = vmatpush.msra.mxu0 0.0
  %1086 = vmatpush.msra.mxu0 0.0
  %1087 = vmatpush.msra.mxu0 0.0
  %1088 = vmatpush.msra.mxu0 0.0
  %1089 = vmatpush.msra.mxu0 %v416
  %1090 = vmatpush.msra.mxu0 %v408
  %1091 = vmatpush.msra.mxu0 %v400
  %1092 = vmatpush.msra.mxu0 %v392
  %1093 = vmatmul.f32.gmra.mxu0 %v515
  %v1094 = vpop.f32.mrf.mxu0
  %v1095 = vadd.f32 0.0, %v1094
  %1096 = vmatmul.f32.gmra.mxu0 %v518
  %v1097 = vpop.f32.mrf.mxu0
  %v1098 = vadd.f32 0.0, %v1097
  %1099 = vmatmul.f32.gmra.mxu0 %v521
  %v1100 = vpop.f32.mrf.mxu0
  %v1101 = vadd.f32 0.0, %v1100
  %1102 = vmatmul.f32.gmra.mxu0 %v524
  %v1103 = vpop.f32.mrf.mxu0
  %v1104 = vadd.f32 0.0, %v1103
  %1105 = vdwg.mxu0
  %1106 = vmatpush.msra.mxu0 0.0
  %1107 = vmatpush.msra.mxu0 0.0
  %1108 = vmatpush.msra.mxu0 0.0
  %1109 = vmatpush.msra.mxu0 0.0
  %1110 = vmatpush.msra.mxu0 0.0
  %1111 = vmatpush.msra.mxu0 0.0
  %1112 = vmatpush.msra.mxu0 0.0
  %1113 = vmatpush.msra.mxu0 0.0
  %1114 = vmatpush.msra.mxu0 0.0
  %1115 = vmatpush.msra.mxu0 0.0
  %1116 = vmatpush.msra.mxu0 0.0
  %1117 = vmatpush.msra.mxu0 0.0
  %1118 = vmatpush.msra.mxu0 %v417
  %1119 = vmatpush.msra.mxu0 %v409
  %1120 = vmatpush.msra.mxu0 %v401
  %1121 = vmatpush.msra.mxu0 %v393
  %1122 = vmatmul.f32.gmra.mxu0 %v515
  %v1123 = vpop.f32.mrf.mxu0
  %v1124 = vadd.f32 0.0, %v1123
  %1125 = vmatmul.f32.gmra.mxu0 %v518
  %v1126 = vpop.f32.mrf.mxu0
  %v1127 = vadd.f32 0.0, %v1126
  %1128 = vmatmul.f32.gmra.mxu0 %v521
  %v1129 = vpop.f32.mrf.mxu0
  %v1130 = vadd.f32 0.0, %v1129
  %1131 = vmatmul.f32.gmra.mxu0 %v524
  %v1132 = vpop.f32.mrf.mxu0
  %v1133 = vadd.f32 0.0, %v1132
  %1134 = vdwg.mxu0
  %1135 = vmatpush.msra.mxu0 0.0
  %1136 = vmatpush.msra.mxu0 0.0
  %1137 = vmatpush.msra.mxu0 0.0
  %1138 = vmatpush.msra.mxu0 0.0
  %1139 = vmatpush.msra.mxu0 0.0
  %1140 = vmatpush.msra.mxu0 0.0
  %1141 = vmatpush.msra.mxu0 0.0
  %1142 = vmatpush.msra.mxu0 0.0
  %1143 = vmatpush.msra.mxu0 0.0
  %1144 = vmatpush.msra.mxu0 0.0
  %1145 = vmatpush.msra.mxu0 0.0
  %1146 = vmatpush.msra.mxu0 0.0
  %1147 = vmatpush.msra.mxu0 %v418
  %1148 = vmatpush.msra.mxu0 %v410
  %1149 = vmatpush.msra.mxu0 %v402
  %1150 = vmatpush.msra.mxu0 %v394
  %1151 = vmatmul.f32.gmra.mxu0 %v515
  %v1152 = vpop.f32.mrf.mxu0
  %v1153 = vadd.f32 0.0, %v1152
  %1154 = vmatmul.f32.gmra.mxu0 %v518
  %v1155 = vpop.f32.mrf.mxu0
  %v1156 = vadd.f32 0.0, %v1155
  %1157 = vmatmul.f32.gmra.mxu0 %v521
  %v1158 = vpop.f32.mrf.mxu0
  %v1159 = vadd.f32 0.0, %v1158
  %1160 = vmatmul.f32.gmra.mxu0 %v524
  %v1161 = vpop.f32.mrf.mxu0
  %v1162 = vadd.f32 0.0, %v1161
  %1163 = vdwg.mxu0
  %1164 = vmatpush.msra.mxu0 0.0
  %1165 = vmatpush.msra.mxu0 0.0
  %1166 = vmatpush.msra.mxu0 0.0
  %1167 = vmatpush.msra.mxu0 0.0
  %1168 = vmatpush.msra.mxu0 0.0
  %1169 = vmatpush.msra.mxu0 0.0
  %1170 = vmatpush.msra.mxu0 0.0
  %1171 = vmatpush.msra.mxu0 0.0
  %1172 = vmatpush.msra.mxu0 0.0
  %1173 = vmatpush.msra.mxu0 0.0
  %1174 = vmatpush.msra.mxu0 0.0
  %1175 = vmatpush.msra.mxu0 0.0
  %1176 = vmatpush.msra.mxu0 %v419
  %1177 = vmatpush.msra.mxu0 %v411
  %1178 = vmatpush.msra.mxu0 %v403
  %1179 = vmatpush.msra.mxu0 %v395
  %1180 = vmatmul.f32.gmra.mxu0 %v515
  %v1181 = vpop.f32.mrf.mxu0
  %v1182 = vadd.f32 0.0, %v1181
  %1183 = vmatmul.f32.gmra.mxu0 %v518
  %v1184 = vpop.f32.mrf.mxu0
  %v1185 = vadd.f32 0.0, %v1184
  %1186 = vmatmul.f32.gmra.mxu0 %v521
  %v1187 = vpop.f32.mrf.mxu0
  %v1188 = vadd.f32 0.0, %v1187
  %1189 = vmatmul.f32.gmra.mxu0 %v524
  %v1190 = vpop.f32.mrf.mxu0
  %v1191 = vadd.f32 0.0, %v1190
  %1192 = vdwg.mxu0
  %1193 = vmatpush.msra.mxu0 0.0
  %1194 = vmatpush.msra.mxu0 0.0
  %1195 = vmatpush.msra.mxu0 0.0
  %1196 = vmatpush.msra.mxu0 0.0
  %1197 = vmatpush.msra.mxu0 0.0
  %1198 = vmatpush.msra.mxu0 0.0
  %1199 = vmatpush.msra.mxu0 0.0
  %1200 = vmatpush.msra.mxu0 0.0
  %1201 = vmatpush.msra.mxu0 0.0
  %1202 = vmatpush.msra.mxu0 0.0
  %1203 = vmatpush.msra.mxu0 0.0
  %1204 = vmatpush.msra.mxu0 0.0
  %1205 = vmatpush.msra.mxu0 %v420
  %1206 = vmatpush.msra.mxu0 %v412
  %1207 = vmatpush.msra.mxu0 %v404
  %1208 = vmatpush.msra.mxu0 %v396
  %1209 = vmatmul.f32.gmra.mxu0 %v515
  %v1210 = vpop.f32.mrf.mxu0
  %v1211 = vadd.f32 0.0, %v1210
  %1212 = vmatmul.f32.gmra.mxu0 %v518
  %v1213 = vpop.f32.mrf.mxu0
  %v1214 = vadd.f32 0.0, %v1213
  %1215 = vmatmul.f32.gmra.mxu0 %v521
  %v1216 = vpop.f32.mrf.mxu0
  %v1217 = vadd.f32 0.0, %v1216
  %1218 = vmatmul.f32.gmra.mxu0 %v524
  %v1219 = vpop.f32.mrf.mxu0
  %v1220 = vadd.f32 0.0, %v1219
  %1221 = vdwg.mxu0
  %1222 = vmatpush.msra.mxu0 0.0
  %1223 = vmatpush.msra.mxu0 0.0
  %1224 = vmatpush.msra.mxu0 0.0
  %1225 = vmatpush.msra.mxu0 0.0
  %1226 = vmatpush.msra.mxu0 0.0
  %1227 = vmatpush.msra.mxu0 0.0
  %1228 = vmatpush.msra.mxu0 0.0
  %1229 = vmatpush.msra.mxu0 0.0
  %1230 = vmatpush.msra.mxu0 0.0
  %1231 = vmatpush.msra.mxu0 0.0
  %1232 = vmatpush.msra.mxu0 0.0
  %1233 = vmatpush.msra.mxu0 0.0
  %1234 = vmatpush.msra.mxu0 %v477
  %1235 = vmatpush.msra.mxu0 %v469
  %1236 = vmatpush.msra.mxu0 %v461
  %1237 = vmatpush.msra.mxu0 %v453
  %1238 = vmatmul.f32.gmra.mxu0 %v515
  %v1239 = vpop.f32.mrf.mxu0
  %v1240 = vadd.f32 0.0, %v1239
  %1241 = vmatmul.f32.gmra.mxu0 %v518
  %v1242 = vpop.f32.mrf.mxu0
  %v1243 = vadd.f32 0.0, %v1242
  %1244 = vmatmul.f32.gmra.mxu0 %v521
  %v1245 = vpop.f32.mrf.mxu0
  %v1246 = vadd.f32 0.0, %v1245
  %1247 = vmatmul.f32.gmra.mxu0 %v524
  %v1248 = vpop.f32.mrf.mxu0
  %v1249 = vadd.f32 0.0, %v1248
  %1250 = vdwg.mxu0
  %1251 = vmatpush.msra.mxu0 0.0
  %1252 = vmatpush.msra.mxu0 0.0
  %1253 = vmatpush.msra.mxu0 0.0
  %1254 = vmatpush.msra.mxu0 0.0
  %1255 = vmatpush.msra.mxu0 0.0
  %1256 = vmatpush.msra.mxu0 0.0
  %1257 = vmatpush.msra.mxu0 0.0
  %1258 = vmatpush.msra.mxu0 0.0
  %1259 = vmatpush.msra.mxu0 0.0
  %1260 = vmatpush.msra.mxu0 0.0
  %1261 = vmatpush.msra.mxu0 0.0
  %1262 = vmatpush.msra.mxu0 0.0
  %1263 = vmatpush.msra.mxu0 %v478
  %1264 = vmatpush.msra.mxu0 %v470
  %1265 = vmatpush.msra.mxu0 %v462
  %1266 = vmatpush.msra.mxu0 %v454
  %1267 = vmatmul.f32.gmra.mxu0 %v515
  %v1268 = vpop.f32.mrf.mxu0
  %v1269 = vadd.f32 0.0, %v1268
  %1270 = vmatmul.f32.gmra.mxu0 %v518
  %v1271 = vpop.f32.mrf.mxu0
  %v1272 = vadd.f32 0.0, %v1271
  %1273 = vmatmul.f32.gmra.mxu0 %v521
  %v1274 = vpop.f32.mrf.mxu0
  %v1275 = vadd.f32 0.0, %v1274
  %1276 = vmatmul.f32.gmra.mxu0 %v524
  %v1277 = vpop.f32.mrf.mxu0
  %v1278 = vadd.f32 0.0, %v1277
  %1279 = vdwg.mxu0
  %1280 = vmatpush.msra.mxu0 0.0
  %1281 = vmatpush.msra.mxu0 0.0
  %1282 = vmatpush.msra.mxu0 0.0
  %1283 = vmatpush.msra.mxu0 0.0
  %1284 = vmatpush.msra.mxu0 0.0
  %1285 = vmatpush.msra.mxu0 0.0
  %1286 = vmatpush.msra.mxu0 0.0
  %1287 = vmatpush.msra.mxu0 0.0
  %1288 = vmatpush.msra.mxu0 0.0
  %1289 = vmatpush.msra.mxu0 0.0
  %1290 = vmatpush.msra.mxu0 0.0
  %1291 = vmatpush.msra.mxu0 0.0
  %1292 = vmatpush.msra.mxu0 %v479
  %1293 = vmatpush.msra.mxu0 %v471
  %1294 = vmatpush.msra.mxu0 %v463
  %1295 = vmatpush.msra.mxu0 %v455
  %1296 = vmatmul.f32.gmra.mxu0 %v515
  %v1297 = vpop.f32.mrf.mxu0
  %v1298 = vadd.f32 0.0, %v1297
  %1299 = vmatmul.f32.gmra.mxu0 %v518
  %v1300 = vpop.f32.mrf.mxu0
  %v1301 = vadd.f32 0.0, %v1300
  %1302 = vmatmul.f32.gmra.mxu0 %v521
  %v1303 = vpop.f32.mrf.mxu0
  %v1304 = vadd.f32 0.0, %v1303
  %1305 = vmatmul.f32.gmra.mxu0 %v524
  %v1306 = vpop.f32.mrf.mxu0
  %v1307 = vadd.f32 0.0, %v1306
  %1308 = vdwg.mxu0
  %1309 = vmatpush.msra.mxu0 0.0
  %1310 = vmatpush.msra.mxu0 0.0
  %1311 = vmatpush.msra.mxu0 0.0
  %1312 = vmatpush.msra.mxu0 0.0
  %1313 = vmatpush.msra.mxu0 0.0
  %1314 = vmatpush.msra.mxu0 0.0
  %1315 = vmatpush.msra.mxu0 0.0
  %1316 = vmatpush.msra.mxu0 0.0
  %1317 = vmatpush.msra.mxu0 0.0
  %1318 = vmatpush.msra.mxu0 0.0
  %1319 = vmatpush.msra.mxu0 0.0
  %1320 = vmatpush.msra.mxu0 0.0
  %1321 = vmatpush.msra.mxu0 %v480
  %1322 = vmatpush.msra.mxu0 %v472
  %1323 = vmatpush.msra.mxu0 %v464
  %1324 = vmatpush.msra.mxu0 %v456
  %1325 = vmatmul.f32.gmra.mxu0 %v515
  %v1326 = vpop.f32.mrf.mxu0
  %v1327 = vadd.f32 0.0, %v1326
  %1328 = vmatmul.f32.gmra.mxu0 %v518
  %v1329 = vpop.f32.mrf.mxu0
  %v1330 = vadd.f32 0.0, %v1329
  %1331 = vmatmul.f32.gmra.mxu0 %v521
  %v1332 = vpop.f32.mrf.mxu0
  %v1333 = vadd.f32 0.0, %v1332
  %1334 = vmatmul.f32.gmra.mxu0 %v524
  %v1335 = vpop.f32.mrf.mxu0
  %v1336 = vadd.f32 0.0, %v1335
  %1337 = vdwg.mxu0
  %1338 = vmatpush.msra.mxu0 0.0
  %1339 = vmatpush.msra.mxu0 0.0
  %1340 = vmatpush.msra.mxu0 0.0
  %1341 = vmatpush.msra.mxu0 0.0
  %1342 = vmatpush.msra.mxu0 0.0
  %1343 = vmatpush.msra.mxu0 0.0
  %1344 = vmatpush.msra.mxu0 0.0
  %1345 = vmatpush.msra.mxu0 0.0
  %1346 = vmatpush.msra.mxu0 0.0
  %1347 = vmatpush.msra.mxu0 0.0
  %1348 = vmatpush.msra.mxu0 0.0
  %1349 = vmatpush.msra.mxu0 0.0
  %1350 = vmatpush.msra.mxu0 %v481
  %1351 = vmatpush.msra.mxu0 %v473
  %1352 = vmatpush.msra.mxu0 %v465
  %1353 = vmatpush.msra.mxu0 %v457
  %1354 = vmatmul.f32.gmra.mxu0 %v515
  %v1355 = vpop.f32.mrf.mxu0
  %v1356 = vadd.f32 0.0, %v1355
  %1357 = vmatmul.f32.gmra.mxu0 %v518
  %v1358 = vpop.f32.mrf.mxu0
  %v1359 = vadd.f32 0.0, %v1358
  %1360 = vmatmul.f32.gmra.mxu0 %v521
  %v1361 = vpop.f32.mrf.mxu0
  %v1362 = vadd.f32 0.0, %v1361
  %1363 = vmatmul.f32.gmra.mxu0 %v524
  %v1364 = vpop.f32.mrf.mxu0
  %v1365 = vadd.f32 0.0, %v1364
  %1366 = vdwg.mxu0
  %1367 = vmatpush.msra.mxu0 0.0
  %1368 = vmatpush.msra.mxu0 0.0
  %1369 = vmatpush.msra.mxu0 0.0
  %1370 = vmatpush.msra.mxu0 0.0
  %1371 = vmatpush.msra.mxu0 0.0
  %1372 = vmatpush.msra.mxu0 0.0
  %1373 = vmatpush.msra.mxu0 0.0
  %1374 = vmatpush.msra.mxu0 0.0
  %1375 = vmatpush.msra.mxu0 0.0
  %1376 = vmatpush.msra.mxu0 0.0
  %1377 = vmatpush.msra.mxu0 0.0
  %1378 = vmatpush.msra.mxu0 0.0
  %1379 = vmatpush.msra.mxu0 %v482
  %1380 = vmatpush.msra.mxu0 %v474
  %1381 = vmatpush.msra.mxu0 %v466
  %1382 = vmatpush.msra.mxu0 %v458
  %1383 = vmatmul.f32.gmra.mxu0 %v515
  %v1384 = vpop.f32.mrf.mxu0
  %v1385 = vadd.f32 0.0, %v1384
  %1386 = vmatmul.f32.gmra.mxu0 %v518
  %v1387 = vpop.f32.mrf.mxu0
  %v1388 = vadd.f32 0.0, %v1387
  %1389 = vmatmul.f32.gmra.mxu0 %v521
  %v1390 = vpop.f32.mrf.mxu0
  %v1391 = vadd.f32 0.0, %v1390
  %1392 = vmatmul.f32.gmra.mxu0 %v524
  %v1393 = vpop.f32.mrf.mxu0
  %v1394 = vadd.f32 0.0, %v1393
  %1395 = vdwg.mxu0
  %1396 = vmatpush.msra.mxu0 0.0
  %1397 = vmatpush.msra.mxu0 0.0
  %1398 = vmatpush.msra.mxu0 0.0
  %1399 = vmatpush.msra.mxu0 0.0
  %1400 = vmatpush.msra.mxu0 0.0
  %1401 = vmatpush.msra.mxu0 0.0
  %1402 = vmatpush.msra.mxu0 0.0
  %1403 = vmatpush.msra.mxu0 0.0
  %1404 = vmatpush.msra.mxu0 0.0
  %1405 = vmatpush.msra.mxu0 0.0
  %1406 = vmatpush.msra.mxu0 0.0
  %1407 = vmatpush.msra.mxu0 0.0
  %1408 = vmatpush.msra.mxu0 %v483
  %1409 = vmatpush.msra.mxu0 %v475
  %1410 = vmatpush.msra.mxu0 %v467
  %1411 = vmatpush.msra.mxu0 %v459
  %1412 = vmatmul.f32.gmra.mxu0 %v515
  %v1413 = vpop.f32.mrf.mxu0
  %v1414 = vadd.f32 0.0, %v1413
  %1415 = vmatmul.f32.gmra.mxu0 %v518
  %v1416 = vpop.f32.mrf.mxu0
  %v1417 = vadd.f32 0.0, %v1416
  %1418 = vmatmul.f32.gmra.mxu0 %v521
  %v1419 = vpop.f32.mrf.mxu0
  %v1420 = vadd.f32 0.0, %v1419
  %1421 = vmatmul.f32.gmra.mxu0 %v524
  %v1422 = vpop.f32.mrf.mxu0
  %v1423 = vadd.f32 0.0, %v1422
  %1424 = vdwg.mxu0
  %1425 = vmatpush.msra.mxu0 0.0
  %1426 = vmatpush.msra.mxu0 0.0
  %1427 = vmatpush.msra.mxu0 0.0
  %1428 = vmatpush.msra.mxu0 0.0
  %1429 = vmatpush.msra.mxu0 0.0
  %1430 = vmatpush.msra.mxu0 0.0
  %1431 = vmatpush.msra.mxu0 0.0
  %1432 = vmatpush.msra.mxu0 0.0
  %1433 = vmatpush.msra.mxu0 0.0
  %1434 = vmatpush.msra.mxu0 0.0
  %1435 = vmatpush.msra.mxu0 0.0
  %1436 = vmatpush.msra.mxu0 0.0
  %1437 = vmatpush.msra.mxu0 %v484
  %1438 = vmatpush.msra.mxu0 %v476
  %1439 = vmatpush.msra.mxu0 %v468
  %1440 = vmatpush.msra.mxu0 %v460
  %1441 = vmatmul.f32.gmra.mxu0 %v515
  %v1442 = vpop.f32.mrf.mxu0
  %v1443 = vadd.f32 0.0, %v1442
  %1444 = vmatmul.f32.gmra.mxu0 %v518
  %v1445 = vpop.f32.mrf.mxu0
  %v1446 = vadd.f32 0.0, %v1445
  %1447 = vmatmul.f32.gmra.mxu0 %v521
  %v1448 = vpop.f32.mrf.mxu0
  %v1449 = vadd.f32 0.0, %v1448
  %1450 = vmatmul.f32.gmra.mxu0 %v524
  %v1451 = vpop.f32.mrf.mxu0
  %v1452 = vadd.f32 0.0, %v1451
  %1453 = vdwg.mxu0
  %v1454 = vtanh.pop %v544
  %v1455 = vtanh.pop %v573
  %v1456 = vtanh.pop %v602
  %v1457 = vtanh.pop %v631
  %v1458 = vtanh.pop %v660
  %v1459 = vtanh.pop %v689
  %v1460 = vtanh.pop %v718
  %v1461 = vtanh.pop %v747
  %v1462 = vtanh.pop %v547
  %v1463 = vtanh.pop %v576
  %v1464 = vtanh.pop %v605
  %v1465 = vtanh.pop %v634
  %v1466 = vtanh.pop %v663
  %v1467 = vtanh.pop %v692
  %v1468 = vtanh.pop %v721
  %v1469 = vtanh.pop %v750
  %v1470 = vtanh.pop %v550
  %v1471 = vtanh.pop %v579
  %v1472 = vtanh.pop %v608
  %v1473 = vtanh.pop %v637
  %v1474 = vtanh.pop %v666
  %v1475 = vtanh.pop %v695
  %v1476 = vtanh.pop %v724
  %v1477 = vtanh.pop %v753
  %v1478 = vtanh.pop %v553
  %v1479 = vtanh.pop %v582
  %v1480 = vtanh.pop %v611
  %v1481 = vtanh.pop %v640
  %v1482 = vtanh.pop %v669
  %v1483 = vtanh.pop %v698
  %v1484 = vtanh.pop %v727
  %v1485 = vtanh.pop %v756
  %v1486 = vmul.f32 %v1454, %v1454
  %v1487 = vmul.f32 %v1455, %v1455
  %v1488 = vmul.f32 %v1456, %v1456
  %v1489 = vmul.f32 %v1457, %v1457
  %v1490 = vmul.f32 %v1458, %v1458
  %v1491 = vmul.f32 %v1459, %v1459
  %v1492 = vmul.f32 %v1460, %v1460
  %v1493 = vmul.f32 %v1461, %v1461
  %v1494 = vmul.f32 %v1462, %v1462
  %v1495 = vmul.f32 %v1463, %v1463
  %v1496 = vmul.f32 %v1464, %v1464
  %v1497 = vmul.f32 %v1465, %v1465
  %v1498 = vmul.f32 %v1466, %v1466
  %v1499 = vmul.f32 %v1467, %v1467
  %v1500 = vmul.f32 %v1468, %v1468
  %v1501 = vmul.f32 %v1469, %v1469
  %v1502 = vmul.f32 %v1470, %v1470
  %v1503 = vmul.f32 %v1471, %v1471
  %v1504 = vmul.f32 %v1472, %v1472
  %v1505 = vmul.f32 %v1473, %v1473
  %v1506 = vmul.f32 %v1474, %v1474
  %v1507 = vmul.f32 %v1475, %v1475
  %v1508 = vmul.f32 %v1476, %v1476
  %v1509 = vmul.f32 %v1477, %v1477
  %v1510 = vmul.f32 %v1478, %v1478
  %v1511 = vmul.f32 %v1479, %v1479
  %v1512 = vmul.f32 %v1480, %v1480
  %v1513 = vmul.f32 %v1481, %v1481
  %v1514 = vmul.f32 %v1482, %v1482
  %v1515 = vmul.f32 %v1483, %v1483
  %v1516 = vmul.f32 %v1484, %v1484
  %v1517 = vmul.f32 %v1485, %v1485
  %v1518 = vsub.f32 1.0, %v1486
  %v1519 = vsub.f32 1.0, %v1487
  %v1520 = vsub.f32 1.0, %v1488
  %v1521 = vsub.f32 1.0, %v1489
  %v1522 = vsub.f32 1.0, %v1490
  %v1523 = vsub.f32 1.0, %v1491
  %v1524 = vsub.f32 1.0, %v1492
  %v1525 = vsub.f32 1.0, %v1493
  %v1526 = vsub.f32 1.0, %v1494
  %v1527 = vsub.f32 1.0, %v1495
  %v1528 = vsub.f32 1.0, %v1496
  %v1529 = vsub.f32 1.0, %v1497
  %v1530 = vsub.f32 1.0, %v1498
  %v1531 = vsub.f32 1.0, %v1499
  %v1532 = vsub.f32 1.0, %v1500
  %v1533 = vsub.f32 1.0, %v1501
  %v1534 = vsub.f32 1.0, %v1502
  %v1535 = vsub.f32 1.0, %v1503
  %v1536 = vsub.f32 1.0, %v1504
  %v1537 = vsub.f32 1.0, %v1505
  %v1538 = vsub.f32 1.0, %v1506
  %v1539 = vsub.f32 1.0, %v1507
  %v1540 = vsub.f32 1.0, %v1508
  %v1541 = vsub.f32 1.0, %v1509
  %v1542 = vsub.f32 1.0, %v1510
  %v1543 = vsub.f32 1.0, %v1511
  %v1544 = vsub.f32 1.0, %v1512
  %v1545 = vsub.f32 1.0, %v1513
  %v1546 = vsub.f32 1.0, %v1514
  %v1547 = vsub.f32 1.0, %v1515
  %v1548 = vsub.f32 1.0, %v1516
  %v1549 = vsub.f32 1.0, %v1517
  %v1550 = vmul.f32 %v1518, %v776
  %v1551 = vmul.f32 %v1519, %v805
  %v1552 = vmul.f32 %v1520, %v834
  %v1553 = vmul.f32 %v1521, %v863
  %v1554 = vmul.f32 %v1522, %v892
  %v1555 = vmul.f32 %v1523, %v921
  %v1556 = vmul.f32 %v1524, %v950
  %v1557 = vmul.f32 %v1525, %v979
  %v1558 = vmul.f32 %v1526, %v779
  %v1559 = vmul.f32 %v1527, %v808
  %v1560 = vmul.f32 %v1528, %v837
  %v1561 = vmul.f32 %v1529, %v866
  %v1562 = vmul.f32 %v1530, %v895
  %v1563 = vmul.f32 %v1531, %v924
  %v1564 = vmul.f32 %v1532, %v953
  %v1565 = vmul.f32 %v1533, %v982
  %v1566 = vmul.f32 %v1534, %v782
  %v1567 = vmul.f32 %v1535, %v811
  %v1568 = vmul.f32 %v1536, %v840
  %v1569 = vmul.f32 %v1537, %v869
  %v1570 = vmul.f32 %v1538, %v898
  %v1571 = vmul.f32 %v1539, %v927
  %v1572 = vmul.f32 %v1540, %v956
  %v1573 = vmul.f32 %v1541, %v985
  %v1574 = vmul.f32 %v1542, %v785
  %v1575 = vmul.f32 %v1543, %v814
  %v1576 = vmul.f32 %v1544, %v843
  %v1577 = vmul.f32 %v1545, %v872
  %v1578 = vmul.f32 %v1546, %v901
  %v1579 = vmul.f32 %v1547, %v930
  %v1580 = vmul.f32 %v1548, %v959
  %v1581 = vmul.f32 %v1549, %v988
  %v1582 = vmul.f32 %v1518, %v1008
  %v1583 = vmul.f32 %v1519, %v1037
  %v1584 = vmul.f32 %v1520, %v1066
  %v1585 = vmul.f32 %v1521, %v1095
  %v1586 = vmul.f32 %v1522, %v1124
  %v1587 = vmul.f32 %v1523, %v1153
  %v1588 = vmul.f32 %v1524, %v1182
  %v1589 = vmul.f32 %v1525, %v1211
  %v1590 = vmul.f32 %v1526, %v1011
  %v1591 = vmul.f32 %v1527, %v1040
  %v1592 = vmul.f32 %v1528, %v1069
  %v1593 = vmul.f32 %v1529, %v1098
  %v1594 = vmul.f32 %v1530, %v1127
  %v1595 = vmul.f32 %v1531, %v1156
  %v1596 = vmul.f32 %v1532, %v1185
  %v1597 = vmul.f32 %v1533, %v1214
  %v1598 = vmul.f32 %v1534, %v1014
  %v1599 = vmul.f32 %v1535, %v1043
  %v1600 = vmul.f32 %v1536, %v1072
  %v1601 = vmul.f32 %v1537, %v1101
  %v1602 = vmul.f32 %v1538, %v1130
  %v1603 = vmul.f32 %v1539, %v1159
  %v1604 = vmul.f32 %v1540, %v1188
  %v1605 = vmul.f32 %v1541, %v1217
  %v1606 = vmul.f32 %v1542, %v1017
  %v1607 = vmul.f32 %v1543, %v1046
  %v1608 = vmul.f32 %v1544, %v1075
  %v1609 = vmul.f32 %v1545, %v1104
  %v1610 = vmul.f32 %v1546, %v1133
  %v1611 = vmul.f32 %v1547, %v1162
  %v1612 = vmul.f32 %v1548, %v1191
  %v1613 = vmul.f32 %v1549, %v1220
  %v1614 = vmul.f32 %v1518, %v1240
  %v1615 = vmul.f32 %v1519, %v1269
  %v1616 = vmul.f32 %v1520, %v1298
  %v1617 = vmul.f32 %v1521, %v1327
  %v1618 = vmul.f32 %v1522, %v1356
  %v1619 = vmul.f32 %v1523, %v1385
  %v1620 = vmul.f32 %v1524, %v1414
  %v1621 = vmul.f32 %v1525, %v1443
  %v1622 = vmul.f32 %v1526, %v1243
  %v1623 = vmul.f32 %v1527, %v1272
  %v1624 = vmul.f32 %v1528, %v1301
  %v1625 = vmul.f32 %v1529, %v1330
  %v1626 = vmul.f32 %v1530, %v1359
  %v1627 = vmul.f32 %v1531, %v1388
  %v1628 = vmul.f32 %v1532, %v1417
  %v1629 = vmul.f32 %v1533, %v1446
  %v1630 = vmul.f32 %v1534, %v1246
  %v1631 = vmul.f32 %v1535, %v1275
  %v1632 = vmul.f32 %v1536, %v1304
  %v1633 = vmul.f32 %v1537, %v1333
  %v1634 = vmul.f32 %v1538, %v1362
  %v1635 = vmul.f32 %v1539, %v1391
  %v1636 = vmul.f32 %v1540, %v1420
  %v1637 = vmul.f32 %v1541, %v1449
  %v1638 = vmul.f32 %v1542, %v1249
  %v1639 = vmul.f32 %v1543, %v1278
  %v1640 = vmul.f32 %v1544, %v1307
  %v1641 = vmul.f32 %v1545, %v1336
  %v1642 = vmul.f32 %v1546, %v1365
  %v1643 = vmul.f32 %v1547, %v1394
  %v1644 = vmul.f32 %v1548, %v1423
  %v1645 = vmul.f32 %v1549, %v1452
  %v1646 = vmul.f32 %v1454, 2.0
  %v1647 = vmul.f32 %v1455, 2.0
  %v1648 = vmul.f32 %v1456, 2.0
  %v1649 = vmul.f32 %v1457, 2.0
  %v1650 = vmul.f32 %v1458, 2.0
  %v1651 = vmul.f32 %v1459, 2.0
  %v1652 = vmul.f32 %v1460, 2.0
  %v1653 = vmul.f32 %v1461, 2.0
  %v1654 = vmul.f32 %v1462, 2.0
  %v1655 = vmul.f32 %v1463, 2.0
  %v1656 = vmul.f32 %v1464, 2.0
  %v1657 = vmul.f32 %v1465, 2.0
  %v1658 = vmul.f32 %v1466, 2.0
  %v1659 = vmul.f32 %v1467, 2.0
  %v1660 = vmul.f32 %v1468, 2.0
  %v1661 = vmul.f32 %v1469, 2.0
  %v1662 = vmul.f32 %v1470, 2.0
  %v1663 = vmul.f32 %v1471, 2.0
  %v1664 = vmul.f32 %v1472, 2.0
  %v1665 = vmul.f32 %v1473, 2.0
  %v1666 = vmul.f32 %v1474, 2.0
  %v1667 = vmul.f32 %v1475, 2.0
  %v1668 = vmul.f32 %v1476, 2.0
  %v1669 = vmul.f32 %v1477, 2.0
  %v1670 = vmul.f32 %v1478, 2.0
  %v1671 = vmul.f32 %v1479, 2.0
  %v1672 = vmul.f32 %v1480, 2.0
  %v1673 = vmul.f32 %v1481, 2.0
  %v1674 = vmul.f32 %v1482, 2.0
  %v1675 = vmul.f32 %v1483, 2.0
  %v1676 = vmul.f32 %v1484, 2.0
  %v1677 = vmul.f32 %v1485, 2.0
  %v1678 = vmul.f32 %v1646, %v1008
  %v1679 = vmul.f32 %v1647, %v1037
  %v1680 = vmul.f32 %v1648, %v1066
  %v1681 = vmul.f32 %v1649, %v1095
  %v1682 = vmul.f32 %v1650, %v1124
  %v1683 = vmul.f32 %v1651, %v1153
  %v1684 = vmul.f32 %v1652, %v1182
  %v1685 = vmul.f32 %v1653, %v1211
  %v1686 = vmul.f32 %v1654, %v1011
  %v1687 = vmul.f32 %v1655, %v1040
  %v1688 = vmul.f32 %v1656, %v1069
  %v1689 = vmul.f32 %v1657, %v1098
  %v1690 = vmul.f32 %v1658, %v1127
  %v1691 = vmul.f32 %v1659, %v1156
  %v1692 = vmul.f32 %v1660, %v1185
  %v1693 = vmul.f32 %v1661, %v1214
  %v1694 = vmul.f32 %v1662, %v1014
  %v1695 = vmul.f32 %v1663, %v1043
  %v1696 = vmul.f32 %v1664, %v1072
  %v1697 = vmul.f32 %v1665, %v1101
  %v1698 = vmul.f32 %v1666, %v1130
  %v1699 = vmul.f32 %v1667, %v1159
  %v1700 = vmul.f32 %v1668, %v1188
  %v1701 = vmul.f32 %v1669, %v1217
  %v1702 = vmul.f32 %v1670, %v1017
  %v1703 = vmul.f32 %v1671, %v1046
  %v1704 = vmul.f32 %v1672, %v1075
  %v1705 = vmul.f32 %v1673, %v1104
  %v1706 = vmul.f32 %v1674, %v1133
  %v1707 = vmul.f32 %v1675, %v1162
  %v1708 = vmul.f32 %v1676, %v1191
  %v1709 = vmul.f32 %v1677, %v1220
  %v1710 = vmul.f32 %v1678, %v1582
  %v1711 = vmul.f32 %v1679, %v1583
  %v1712 = vmul.f32 %v1680, %v1584
  %v1713 = vmul.f32 %v1681, %v1585
  %v1714 = vmul.f32 %v1682, %v1586
  %v1715 = vmul.f32 %v1683, %v1587
  %v1716 = vmul.f32 %v1684, %v1588
  %v1717 = vmul.f32 %v1685, %v1589
  %v1718 = vmul.f32 %v1686, %v1590
  %v1719 = vmul.f32 %v1687, %v1591
  %v1720 = vmul.f32 %v1688, %v1592
  %v1721 = vmul.f32 %v1689, %v1593
  %v1722 = vmul.f32 %v1690, %v1594
  %v1723 = vmul.f32 %v1691, %v1595
  %v1724 = vmul.f32 %v1692, %v1596
  %v1725 = vmul.f32 %v1693, %v1597
  %v1726 = vmul.f32 %v1694, %v1598
  %v1727 = vmul.f32 %v1695, %v1599
  %v1728 = vmul.f32 %v1696, %v1600
  %v1729 = vmul.f32 %v1697, %v1601
  %v1730 = vmul.f32 %v1698, %v1602
  %v1731 = vmul.f32 %v1699, %v1603
  %v1732 = vmul.f32 %v1700, %v1604
  %v1733 = vmul.f32 %v1701, %v1605
  %v1734 = vmul.f32 %v1702, %v1606
  %v1735 = vmul.f32 %v1703, %v1607
  %v1736 = vmul.f32 %v1704, %v1608
  %v1737 = vmul.f32 %v1705, %v1609
  %v1738 = vmul.f32 %v1706, %v1610
  %v1739 = vmul.f32 %v1707, %v1611
  %v1740 = vmul.f32 %v1708, %v1612
  %v1741 = vmul.f32 %v1709, %v1613
  %v1742 = vsub.f32 %v1614, %v1710
  %v1743 = vsub.f32 %v1615, %v1711
  %v1744 = vsub.f32 %v1616, %v1712
  %v1745 = vsub.f32 %v1617, %v1713
  %v1746 = vsub.f32 %v1618, %v1714
  %v1747 = vsub.f32 %v1619, %v1715
  %v1748 = vsub.f32 %v1620, %v1716
  %v1749 = vsub.f32 %v1621, %v1717
  %v1750 = vsub.f32 %v1622, %v1718
  %v1751 = vsub.f32 %v1623, %v1719
  %v1752 = vsub.f32 %v1624, %v1720
  %v1753 = vsub.f32 %v1625, %v1721
  %v1754 = vsub.f32 %v1626, %v1722
  %v1755 = vsub.f32 %v1627, %v1723
  %v1756 = vsub.f32 %v1628, %v1724
  %v1757 = vsub.f32 %v1629, %v1725
  %v1758 = vsub.f32 %v1630, %v1726
  %v1759 = vsub.f32 %v1631, %v1727
  %v1760 = vsub.f32 %v1632, %v1728
  %v1761 = vsub.f32 %v1633, %v1729
  %v1762 = vsub.f32 %v1634, %v1730
  %v1763 = vsub.f32 %v1635, %v1731
  %v1764 = vsub.f32 %v1636, %v1732
  %v1765 = vsub.f32 %v1637, %v1733
  %v1766 = vsub.f32 %v1638, %v1734
  %v1767 = vsub.f32 %v1639, %v1735
  %v1768 = vsub.f32 %v1640, %v1736
  %v1769 = vsub.f32 %v1641, %v1737
  %v1770 = vsub.f32 %v1642, %v1738
  %v1771 = vsub.f32 %v1643, %v1739
  %v1772 = vsub.f32 %v1644, %v1740
  %v1773 = vsub.f32 %v1645, %v1741
  %v1774 = vld [vmem:[%s5] sm:$0x1]
  %v1775 = vld [vmem:[#allocation2] sm:$0x1]
  %1777 = vset.pattern.permute.xlu0 0
  %1778 = vperm.xlu0 %1777, %v1775
  %v1779 = vpop.permute.xlu0 %1778
  %v1781 = vperm.slane %v1779, 0
  %v1783 = vsel %vm513, %v1774, 0
  %1785 = vmatpush.msra.mxu0 0.0
  %1786 = vmatpush.msra.mxu0 0.0
  %1787 = vmatpush.msra.mxu0 0.0
  %1788 = vmatpush.msra.mxu0 0.0
  %1789 = vmatpush.msra.mxu0 0.0
  %1790 = vmatpush.msra.mxu0 0.0
  %1791 = vmatpush.msra.mxu0 0.0
  %1792 = vmatpush.msra.mxu0 0.0
  %1793 = vmatpush.msra.mxu0 0.0
  %1794 = vmatpush.msra.mxu0 0.0
  %1795 = vmatpush.msra.mxu0 0.0
  %1796 = vmatpush.msra.mxu0 0.0
  %1797 = vmatpush.msra.mxu0 %v1478
  %1798 = vmatpush.msra.mxu0 %v1470
  %1799 = vmatpush.msra.mxu0 %v1462
  %1800 = vmatpush.msra.mxu0 %v1454
  %1801 = vmatmul.f32.gmra.mxu0 %v1783
  %v1802 = vpop.f32.mrf.mxu0
  %v1803 = vadd.f32 %v1781, %v1802
  %1804 = vdwg.mxu0
  %1805 = vmatpush.msra.mxu0 0.0
  %1806 = vmatpush.msra.mxu0 0.0
  %1807 = vmatpush.msra.mxu0 0.0
  %1808 = vmatpush.msra.mxu0 0.0
  %1809 = vmatpush.msra.mxu0 0.0
  %1810 = vmatpush.msra.mxu0 0.0
  %1811 = vmatpush.msra.mxu0 0.0
  %1812 = vmatpush.msra.mxu0 0.0
  %1813 = vmatpush.msra.mxu0 0.0
  %1814 = vmatpush.msra.mxu0 0.0
  %1815 = vmatpush.msra.mxu0 0.0
  %1816 = vmatpush.msra.mxu0 0.0
  %1817 = vmatpush.msra.mxu0 %v1479
  %1818 = vmatpush.msra.mxu0 %v1471
  %1819 = vmatpush.msra.mxu0 %v1463
  %1820 = vmatpush.msra.mxu0 %v1455
  %1821 = vmatmul.f32.gmra.mxu0 %v1783
  %v1822 = vpop.f32.mrf.mxu0
  %v1823 = vadd.f32 %v1781, %v1822
  %1824 = vdwg.mxu0
  %1825 = vmatpush.msra.mxu0 0.0
  %1826 = vmatpush.msra.mxu0 0.0
  %1827 = vmatpush.msra.mxu0 0.0
  %1828 = vmatpush.msra.mxu0 0.0
  %1829 = vmatpush.msra.mxu0 0.0
  %1830 = vmatpush.msra.mxu0 0.0
  %1831 = vmatpush.msra.mxu0 0.0
  %1832 = vmatpush.msra.mxu0 0.0
  %1833 = vmatpush.msra.mxu0 0.0
  %1834 = vmatpush.msra.mxu0 0.0
  %1835 = vmatpush.msra.mxu0 0.0
  %1836 = vmatpush.msra.mxu0 0.0
  %1837 = vmatpush.msra.mxu0 %v1480
  %1838 = vmatpush.msra.mxu0 %v1472
  %1839 = vmatpush.msra.mxu0 %v1464
  %1840 = vmatpush.msra.mxu0 %v1456
  %1841 = vmatmul.f32.gmra.mxu0 %v1783
  %v1842 = vpop.f32.mrf.mxu0
  %v1843 = vadd.f32 %v1781, %v1842
  %1844 = vdwg.mxu0
  %1845 = vmatpush.msra.mxu0 0.0
  %1846 = vmatpush.msra.mxu0 0.0
  %1847 = vmatpush.msra.mxu0 0.0
  %1848 = vmatpush.msra.mxu0 0.0
  %1849 = vmatpush.msra.mxu0 0.0
  %1850 = vmatpush.msra.mxu0 0.0
  %1851 = vmatpush.msra.mxu0 0.0
  %1852 = vmatpush.msra.mxu0 0.0
  %1853 = vmatpush.msra.mxu0 0.0
  %1854 = vmatpush.msra.mxu0 0.0
  %1855 = vmatpush.msra.mxu0 0.0
  %1856 = vmatpush.msra.mxu0 0.0
  %1857 = vmatpush.msra.mxu0 %v1481
  %1858 = vmatpush.msra.mxu0 %v1473
  %1859 = vmatpush.msra.mxu0 %v1465
  %1860 = vmatpush.msra.mxu0 %v1457
  %1861 = vmatmul.f32.gmra.mxu0 %v1783
  %v1862 = vpop.f32.mrf.mxu0
  %v1863 = vadd.f32 %v1781, %v1862
  %1864 = vdwg.mxu0
  %1865 = vmatpush.msra.mxu0 0.0
  %1866 = vmatpush.msra.mxu0 0.0
  %1867 = vmatpush.msra.mxu0 0.0
  %1868 = vmatpush.msra.mxu0 0.0
  %1869 = vmatpush.msra.mxu0 0.0
  %1870 = vmatpush.msra.mxu0 0.0
  %1871 = vmatpush.msra.mxu0 0.0
  %1872 = vmatpush.msra.mxu0 0.0
  %1873 = vmatpush.msra.mxu0 0.0
  %1874 = vmatpush.msra.mxu0 0.0
  %1875 = vmatpush.msra.mxu0 0.0
  %1876 = vmatpush.msra.mxu0 0.0
  %1877 = vmatpush.msra.mxu0 %v1482
  %1878 = vmatpush.msra.mxu0 %v1474
  %1879 = vmatpush.msra.mxu0 %v1466
  %1880 = vmatpush.msra.mxu0 %v1458
  %1881 = vmatmul.f32.gmra.mxu0 %v1783
  %v1882 = vpop.f32.mrf.mxu0
  %v1883 = vadd.f32 %v1781, %v1882
  %1884 = vdwg.mxu0
  %1885 = vmatpush.msra.mxu0 0.0
  %1886 = vmatpush.msra.mxu0 0.0
  %1887 = vmatpush.msra.mxu0 0.0
  %1888 = vmatpush.msra.mxu0 0.0
  %1889 = vmatpush.msra.mxu0 0.0
  %1890 = vmatpush.msra.mxu0 0.0
  %1891 = vmatpush.msra.mxu0 0.0
  %1892 = vmatpush.msra.mxu0 0.0
  %1893 = vmatpush.msra.mxu0 0.0
  %1894 = vmatpush.msra.mxu0 0.0
  %1895 = vmatpush.msra.mxu0 0.0
  %1896 = vmatpush.msra.mxu0 0.0
  %1897 = vmatpush.msra.mxu0 %v1483
  %1898 = vmatpush.msra.mxu0 %v1475
  %1899 = vmatpush.msra.mxu0 %v1467
  %1900 = vmatpush.msra.mxu0 %v1459
  %1901 = vmatmul.f32.gmra.mxu0 %v1783
  %v1902 = vpop.f32.mrf.mxu0
  %v1903 = vadd.f32 %v1781, %v1902
  %1904 = vdwg.mxu0
  %1905 = vmatpush.msra.mxu0 0.0
  %1906 = vmatpush.msra.mxu0 0.0
  %1907 = vmatpush.msra.mxu0 0.0
  %1908 = vmatpush.msra.mxu0 0.0
  %1909 = vmatpush.msra.mxu0 0.0
  %1910 = vmatpush.msra.mxu0 0.0
  %1911 = vmatpush.msra.mxu0 0.0
  %1912 = vmatpush.msra.mxu0 0.0
  %1913 = vmatpush.msra.mxu0 0.0
  %1914 = vmatpush.msra.mxu0 0.0
  %1915 = vmatpush.msra.mxu0 0.0
  %1916 = vmatpush.msra.mxu0 0.0
  %1917 = vmatpush.msra.mxu0 %v1484
  %1918 = vmatpush.msra.mxu0 %v1476
  %1919 = vmatpush.msra.mxu0 %v1468
  %1920 = vmatpush.msra.mxu0 %v1460
  %1921 = vmatmul.f32.gmra.mxu0 %v1783
  %v1922 = vpop.f32.mrf.mxu0
  %v1923 = vadd.f32 %v1781, %v1922
  %1924 = vdwg.mxu0
  %1925 = vmatpush.msra.mxu0 0.0
  %1926 = vmatpush.msra.mxu0 0.0
  %1927 = vmatpush.msra.mxu0 0.0
  %1928 = vmatpush.msra.mxu0 0.0
  %1929 = vmatpush.msra.mxu0 0.0
  %1930 = vmatpush.msra.mxu0 0.0
  %1931 = vmatpush.msra.mxu0 0.0
  %1932 = vmatpush.msra.mxu0 0.0
  %1933 = vmatpush.msra.mxu0 0.0
  %1934 = vmatpush.msra.mxu0 0.0
  %1935 = vmatpush.msra.mxu0 0.0
  %1936 = vmatpush.msra.mxu0 0.0
  %1937 = vmatpush.msra.mxu0 %v1485
  %1938 = vmatpush.msra.mxu0 %v1477
  %1939 = vmatpush.msra.mxu0 %v1469
  %1940 = vmatpush.msra.mxu0 %v1461
  %1941 = vmatmul.f32.gmra.mxu0 %v1783
  %v1942 = vpop.f32.mrf.mxu0
  %v1943 = vadd.f32 %v1781, %v1942
  %1944 = vdwg.mxu0
  %1945 = vmatpush.msra.mxu0 0.0
  %1946 = vmatpush.msra.mxu0 0.0
  %1947 = vmatpush.msra.mxu0 0.0
  %1948 = vmatpush.msra.mxu0 0.0
  %1949 = vmatpush.msra.mxu0 0.0
  %1950 = vmatpush.msra.mxu0 0.0
  %1951 = vmatpush.msra.mxu0 0.0
  %1952 = vmatpush.msra.mxu0 0.0
  %1953 = vmatpush.msra.mxu0 0.0
  %1954 = vmatpush.msra.mxu0 0.0
  %1955 = vmatpush.msra.mxu0 0.0
  %1956 = vmatpush.msra.mxu0 0.0
  %1957 = vmatpush.msra.mxu0 %v1574
  %1958 = vmatpush.msra.mxu0 %v1566
  %1959 = vmatpush.msra.mxu0 %v1558
  %1960 = vmatpush.msra.mxu0 %v1550
  %1961 = vmatmul.f32.gmra.mxu0 %v1783
  %v1962 = vpop.f32.mrf.mxu0
  %v1963 = vadd.f32 0.0, %v1962
  %1964 = vdwg.mxu0
  %1965 = vmatpush.msra.mxu0 0.0
  %1966 = vmatpush.msra.mxu0 0.0
  %1967 = vmatpush.msra.mxu0 0.0
  %1968 = vmatpush.msra.mxu0 0.0
  %1969 = vmatpush.msra.mxu0 0.0
  %1970 = vmatpush.msra.mxu0 0.0
  %1971 = vmatpush.msra.mxu0 0.0
  %1972 = vmatpush.msra.mxu0 0.0
  %1973 = vmatpush.msra.mxu0 0.0
  %1974 = vmatpush.msra.mxu0 0.0
  %1975 = vmatpush.msra.mxu0 0.0
  %1976 = vmatpush.msra.mxu0 0.0
  %1977 = vmatpush.msra.mxu0 %v1575
  %1978 = vmatpush.msra.mxu0 %v1567
  %1979 = vmatpush.msra.mxu0 %v1559
  %1980 = vmatpush.msra.mxu0 %v1551
  %1981 = vmatmul.f32.gmra.mxu0 %v1783
  %v1982 = vpop.f32.mrf.mxu0
  %v1983 = vadd.f32 0.0, %v1982
  %1984 = vdwg.mxu0
  %1985 = vmatpush.msra.mxu0 0.0
  %1986 = vmatpush.msra.mxu0 0.0
  %1987 = vmatpush.msra.mxu0 0.0
  %1988 = vmatpush.msra.mxu0 0.0
  %1989 = vmatpush.msra.mxu0 0.0
  %1990 = vmatpush.msra.mxu0 0.0
  %1991 = vmatpush.msra.mxu0 0.0
  %1992 = vmatpush.msra.mxu0 0.0
  %1993 = vmatpush.msra.mxu0 0.0
  %1994 = vmatpush.msra.mxu0 0.0
  %1995 = vmatpush.msra.mxu0 0.0
  %1996 = vmatpush.msra.mxu0 0.0
  %1997 = vmatpush.msra.mxu0 %v1576
  %1998 = vmatpush.msra.mxu0 %v1568
  %1999 = vmatpush.msra.mxu0 %v1560
  %2000 = vmatpush.msra.mxu0 %v1552
  %2001 = vmatmul.f32.gmra.mxu0 %v1783
  %v2002 = vpop.f32.mrf.mxu0
  %v2003 = vadd.f32 0.0, %v2002
  %2004 = vdwg.mxu0
  %2005 = vmatpush.msra.mxu0 0.0
  %2006 = vmatpush.msra.mxu0 0.0
  %2007 = vmatpush.msra.mxu0 0.0
  %2008 = vmatpush.msra.mxu0 0.0
  %2009 = vmatpush.msra.mxu0 0.0
  %2010 = vmatpush.msra.mxu0 0.0
  %2011 = vmatpush.msra.mxu0 0.0
  %2012 = vmatpush.msra.mxu0 0.0
  %2013 = vmatpush.msra.mxu0 0.0
  %2014 = vmatpush.msra.mxu0 0.0
  %2015 = vmatpush.msra.mxu0 0.0
  %2016 = vmatpush.msra.mxu0 0.0
  %2017 = vmatpush.msra.mxu0 %v1577
  %2018 = vmatpush.msra.mxu0 %v1569
  %2019 = vmatpush.msra.mxu0 %v1561
  %2020 = vmatpush.msra.mxu0 %v1553
  %2021 = vmatmul.f32.gmra.mxu0 %v1783
  %v2022 = vpop.f32.mrf.mxu0
  %v2023 = vadd.f32 0.0, %v2022
  %2024 = vdwg.mxu0
  %2025 = vmatpush.msra.mxu0 0.0
  %2026 = vmatpush.msra.mxu0 0.0
  %2027 = vmatpush.msra.mxu0 0.0
  %2028 = vmatpush.msra.mxu0 0.0
  %2029 = vmatpush.msra.mxu0 0.0
  %2030 = vmatpush.msra.mxu0 0.0
  %2031 = vmatpush.msra.mxu0 0.0
  %2032 = vmatpush.msra.mxu0 0.0
  %2033 = vmatpush.msra.mxu0 0.0
  %2034 = vmatpush.msra.mxu0 0.0
  %2035 = vmatpush.msra.mxu0 0.0
  %2036 = vmatpush.msra.mxu0 0.0
  %2037 = vmatpush.msra.mxu0 %v1578
  %2038 = vmatpush.msra.mxu0 %v1570
  %2039 = vmatpush.msra.mxu0 %v1562
  %2040 = vmatpush.msra.mxu0 %v1554
  %2041 = vmatmul.f32.gmra.mxu0 %v1783
  %v2042 = vpop.f32.mrf.mxu0
  %v2043 = vadd.f32 0.0, %v2042
  %2044 = vdwg.mxu0
  %2045 = vmatpush.msra.mxu0 0.0
  %2046 = vmatpush.msra.mxu0 0.0
  %2047 = vmatpush.msra.mxu0 0.0
  %2048 = vmatpush.msra.mxu0 0.0
  %2049 = vmatpush.msra.mxu0 0.0
  %2050 = vmatpush.msra.mxu0 0.0
  %2051 = vmatpush.msra.mxu0 0.0
  %2052 = vmatpush.msra.mxu0 0.0
  %2053 = vmatpush.msra.mxu0 0.0
  %2054 = vmatpush.msra.mxu0 0.0
  %2055 = vmatpush.msra.mxu0 0.0
  %2056 = vmatpush.msra.mxu0 0.0
  %2057 = vmatpush.msra.mxu0 %v1579
  %2058 = vmatpush.msra.mxu0 %v1571
  %2059 = vmatpush.msra.mxu0 %v1563
  %2060 = vmatpush.msra.mxu0 %v1555
  %2061 = vmatmul.f32.gmra.mxu0 %v1783
  %v2062 = vpop.f32.mrf.mxu0
  %v2063 = vadd.f32 0.0, %v2062
  %2064 = vdwg.mxu0
  %2065 = vmatpush.msra.mxu0 0.0
  %2066 = vmatpush.msra.mxu0 0.0
  %2067 = vmatpush.msra.mxu0 0.0
  %2068 = vmatpush.msra.mxu0 0.0
  %2069 = vmatpush.msra.mxu0 0.0
  %2070 = vmatpush.msra.mxu0 0.0
  %2071 = vmatpush.msra.mxu0 0.0
  %2072 = vmatpush.msra.mxu0 0.0
  %2073 = vmatpush.msra.mxu0 0.0
  %2074 = vmatpush.msra.mxu0 0.0
  %2075 = vmatpush.msra.mxu0 0.0
  %2076 = vmatpush.msra.mxu0 0.0
  %2077 = vmatpush.msra.mxu0 %v1580
  %2078 = vmatpush.msra.mxu0 %v1572
  %2079 = vmatpush.msra.mxu0 %v1564
  %2080 = vmatpush.msra.mxu0 %v1556
  %2081 = vmatmul.f32.gmra.mxu0 %v1783
  %v2082 = vpop.f32.mrf.mxu0
  %v2083 = vadd.f32 0.0, %v2082
  %2084 = vdwg.mxu0
  %2085 = vmatpush.msra.mxu0 0.0
  %2086 = vmatpush.msra.mxu0 0.0
  %2087 = vmatpush.msra.mxu0 0.0
  %2088 = vmatpush.msra.mxu0 0.0
  %2089 = vmatpush.msra.mxu0 0.0
  %2090 = vmatpush.msra.mxu0 0.0
  %2091 = vmatpush.msra.mxu0 0.0
  %2092 = vmatpush.msra.mxu0 0.0
  %2093 = vmatpush.msra.mxu0 0.0
  %2094 = vmatpush.msra.mxu0 0.0
  %2095 = vmatpush.msra.mxu0 0.0
  %2096 = vmatpush.msra.mxu0 0.0
  %2097 = vmatpush.msra.mxu0 %v1581
  %2098 = vmatpush.msra.mxu0 %v1573
  %2099 = vmatpush.msra.mxu0 %v1565
  %2100 = vmatpush.msra.mxu0 %v1557
  %2101 = vmatmul.f32.gmra.mxu0 %v1783
  %v2102 = vpop.f32.mrf.mxu0
  %v2103 = vadd.f32 0.0, %v2102
  %2104 = vdwg.mxu0
  %2105 = vmatpush.msra.mxu0 0.0
  %2106 = vmatpush.msra.mxu0 0.0
  %2107 = vmatpush.msra.mxu0 0.0
  %2108 = vmatpush.msra.mxu0 0.0
  %2109 = vmatpush.msra.mxu0 0.0
  %2110 = vmatpush.msra.mxu0 0.0
  %2111 = vmatpush.msra.mxu0 0.0
  %2112 = vmatpush.msra.mxu0 0.0
  %2113 = vmatpush.msra.mxu0 0.0
  %2114 = vmatpush.msra.mxu0 0.0
  %2115 = vmatpush.msra.mxu0 0.0
  %2116 = vmatpush.msra.mxu0 0.0
  %2117 = vmatpush.msra.mxu0 %v1606
  %2118 = vmatpush.msra.mxu0 %v1598
  %2119 = vmatpush.msra.mxu0 %v1590
  %2120 = vmatpush.msra.mxu0 %v1582
  %2121 = vmatmul.f32.gmra.mxu0 %v1783
  %v2122 = vpop.f32.mrf.mxu0
  %v2123 = vadd.f32 0.0, %v2122
  %2124 = vdwg.mxu0
  %2125 = vmatpush.msra.mxu0 0.0
  %2126 = vmatpush.msra.mxu0 0.0
  %2127 = vmatpush.msra.mxu0 0.0
  %2128 = vmatpush.msra.mxu0 0.0
  %2129 = vmatpush.msra.mxu0 0.0
  %2130 = vmatpush.msra.mxu0 0.0
  %2131 = vmatpush.msra.mxu0 0.0
  %2132 = vmatpush.msra.mxu0 0.0
  %2133 = vmatpush.msra.mxu0 0.0
  %2134 = vmatpush.msra.mxu0 0.0
  %2135 = vmatpush.msra.mxu0 0.0
  %2136 = vmatpush.msra.mxu0 0.0
  %2137 = vmatpush.msra.mxu0 %v1607
  %2138 = vmatpush.msra.mxu0 %v1599
  %2139 = vmatpush.msra.mxu0 %v1591
  %2140 = vmatpush.msra.mxu0 %v1583
  %2141 = vmatmul.f32.gmra.mxu0 %v1783
  %v2142 = vpop.f32.mrf.mxu0
  %v2143 = vadd.f32 0.0, %v2142
  %2144 = vdwg.mxu0
  %2145 = vmatpush.msra.mxu0 0.0
  %2146 = vmatpush.msra.mxu0 0.0
  %2147 = vmatpush.msra.mxu0 0.0
  %2148 = vmatpush.msra.mxu0 0.0
  %2149 = vmatpush.msra.mxu0 0.0
  %2150 = vmatpush.msra.mxu0 0.0
  %2151 = vmatpush.msra.mxu0 0.0
  %2152 = vmatpush.msra.mxu0 0.0
  %2153 = vmatpush.msra.mxu0 0.0
  %2154 = vmatpush.msra.mxu0 0.0
  %2155 = vmatpush.msra.mxu0 0.0
  %2156 = vmatpush.msra.mxu0 0.0
  %2157 = vmatpush.msra.mxu0 %v1608
  %2158 = vmatpush.msra.mxu0 %v1600
  %2159 = vmatpush.msra.mxu0 %v1592
  %2160 = vmatpush.msra.mxu0 %v1584
  %2161 = vmatmul.f32.gmra.mxu0 %v1783
  %v2162 = vpop.f32.mrf.mxu0
  %v2163 = vadd.f32 0.0, %v2162
  %2164 = vdwg.mxu0
  %2165 = vmatpush.msra.mxu0 0.0
  %2166 = vmatpush.msra.mxu0 0.0
  %2167 = vmatpush.msra.mxu0 0.0
  %2168 = vmatpush.msra.mxu0 0.0
  %2169 = vmatpush.msra.mxu0 0.0
  %2170 = vmatpush.msra.mxu0 0.0
  %2171 = vmatpush.msra.mxu0 0.0
  %2172 = vmatpush.msra.mxu0 0.0
  %2173 = vmatpush.msra.mxu0 0.0
  %2174 = vmatpush.msra.mxu0 0.0
  %2175 = vmatpush.msra.mxu0 0.0
  %2176 = vmatpush.msra.mxu0 0.0
  %2177 = vmatpush.msra.mxu0 %v1609
  %2178 = vmatpush.msra.mxu0 %v1601
  %2179 = vmatpush.msra.mxu0 %v1593
  %2180 = vmatpush.msra.mxu0 %v1585
  %2181 = vmatmul.f32.gmra.mxu0 %v1783
  %v2182 = vpop.f32.mrf.mxu0
  %v2183 = vadd.f32 0.0, %v2182
  %2184 = vdwg.mxu0
  %2185 = vmatpush.msra.mxu0 0.0
  %2186 = vmatpush.msra.mxu0 0.0
  %2187 = vmatpush.msra.mxu0 0.0
  %2188 = vmatpush.msra.mxu0 0.0
  %2189 = vmatpush.msra.mxu0 0.0
  %2190 = vmatpush.msra.mxu0 0.0
  %2191 = vmatpush.msra.mxu0 0.0
  %2192 = vmatpush.msra.mxu0 0.0
  %2193 = vmatpush.msra.mxu0 0.0
  %2194 = vmatpush.msra.mxu0 0.0
  %2195 = vmatpush.msra.mxu0 0.0
  %2196 = vmatpush.msra.mxu0 0.0
  %2197 = vmatpush.msra.mxu0 %v1610
  %2198 = vmatpush.msra.mxu0 %v1602
  %2199 = vmatpush.msra.mxu0 %v1594
  %2200 = vmatpush.msra.mxu0 %v1586
  %2201 = vmatmul.f32.gmra.mxu0 %v1783
  %v2202 = vpop.f32.mrf.mxu0
  %v2203 = vadd.f32 0.0, %v2202
  %2204 = vdwg.mxu0
  %2205 = vmatpush.msra.mxu0 0.0
  %2206 = vmatpush.msra.mxu0 0.0
  %2207 = vmatpush.msra.mxu0 0.0
  %2208 = vmatpush.msra.mxu0 0.0
  %2209 = vmatpush.msra.mxu0 0.0
  %2210 = vmatpush.msra.mxu0 0.0
  %2211 = vmatpush.msra.mxu0 0.0
  %2212 = vmatpush.msra.mxu0 0.0
  %2213 = vmatpush.msra.mxu0 0.0
  %2214 = vmatpush.msra.mxu0 0.0
  %2215 = vmatpush.msra.mxu0 0.0
  %2216 = vmatpush.msra.mxu0 0.0
  %2217 = vmatpush.msra.mxu0 %v1611
  %2218 = vmatpush.msra.mxu0 %v1603
  %2219 = vmatpush.msra.mxu0 %v1595
  %2220 = vmatpush.msra.mxu0 %v1587
  %2221 = vmatmul.f32.gmra.mxu0 %v1783
  %v2222 = vpop.f32.mrf.mxu0
  %v2223 = vadd.f32 0.0, %v2222
  %2224 = vdwg.mxu0
  %2225 = vmatpush.msra.mxu0 0.0
  %2226 = vmatpush.msra.mxu0 0.0
  %2227 = vmatpush.msra.mxu0 0.0
  %2228 = vmatpush.msra.mxu0 0.0
  %2229 = vmatpush.msra.mxu0 0.0
  %2230 = vmatpush.msra.mxu0 0.0
  %2231 = vmatpush.msra.mxu0 0.0
  %2232 = vmatpush.msra.mxu0 0.0
  %2233 = vmatpush.msra.mxu0 0.0
  %2234 = vmatpush.msra.mxu0 0.0
  %2235 = vmatpush.msra.mxu0 0.0
  %2236 = vmatpush.msra.mxu0 0.0
  %2237 = vmatpush.msra.mxu0 %v1612
  %2238 = vmatpush.msra.mxu0 %v1604
  %2239 = vmatpush.msra.mxu0 %v1596
  %2240 = vmatpush.msra.mxu0 %v1588
  %2241 = vmatmul.f32.gmra.mxu0 %v1783
  %v2242 = vpop.f32.mrf.mxu0
  %v2243 = vadd.f32 0.0, %v2242
  %2244 = vdwg.mxu0
  %2245 = vmatpush.msra.mxu0 0.0
  %2246 = vmatpush.msra.mxu0 0.0
  %2247 = vmatpush.msra.mxu0 0.0
  %2248 = vmatpush.msra.mxu0 0.0
  %2249 = vmatpush.msra.mxu0 0.0
  %2250 = vmatpush.msra.mxu0 0.0
  %2251 = vmatpush.msra.mxu0 0.0
  %2252 = vmatpush.msra.mxu0 0.0
  %2253 = vmatpush.msra.mxu0 0.0
  %2254 = vmatpush.msra.mxu0 0.0
  %2255 = vmatpush.msra.mxu0 0.0
  %2256 = vmatpush.msra.mxu0 0.0
  %2257 = vmatpush.msra.mxu0 %v1613
  %2258 = vmatpush.msra.mxu0 %v1605
  %2259 = vmatpush.msra.mxu0 %v1597
  %2260 = vmatpush.msra.mxu0 %v1589
  %2261 = vmatmul.f32.gmra.mxu0 %v1783
  %v2262 = vpop.f32.mrf.mxu0
  %v2263 = vadd.f32 0.0, %v2262
  %2264 = vdwg.mxu0
  %2265 = vmatpush.msra.mxu0 0.0
  %2266 = vmatpush.msra.mxu0 0.0
  %2267 = vmatpush.msra.mxu0 0.0
  %2268 = vmatpush.msra.mxu0 0.0
  %2269 = vmatpush.msra.mxu0 0.0
  %2270 = vmatpush.msra.mxu0 0.0
  %2271 = vmatpush.msra.mxu0 0.0
  %2272 = vmatpush.msra.mxu0 0.0
  %2273 = vmatpush.msra.mxu0 0.0
  %2274 = vmatpush.msra.mxu0 0.0
  %2275 = vmatpush.msra.mxu0 0.0
  %2276 = vmatpush.msra.mxu0 0.0
  %2277 = vmatpush.msra.mxu0 %v1766
  %2278 = vmatpush.msra.mxu0 %v1758
  %2279 = vmatpush.msra.mxu0 %v1750
  %2280 = vmatpush.msra.mxu0 %v1742
  %2281 = vmatmul.f32.gmra.mxu0 %v1783
  %v2282 = vpop.f32.mrf.mxu0
  %v2283 = vadd.f32 0.0, %v2282
  %2284 = vdwg.mxu0
  %2285 = vmatpush.msra.mxu0 0.0
  %2286 = vmatpush.msra.mxu0 0.0
  %2287 = vmatpush.msra.mxu0 0.0
  %2288 = vmatpush.msra.mxu0 0.0
  %2289 = vmatpush.msra.mxu0 0.0
  %2290 = vmatpush.msra.mxu0 0.0
  %2291 = vmatpush.msra.mxu0 0.0
  %2292 = vmatpush.msra.mxu0 0.0
  %2293 = vmatpush.msra.mxu0 0.0
  %2294 = vmatpush.msra.mxu0 0.0
  %2295 = vmatpush.msra.mxu0 0.0
  %2296 = vmatpush.msra.mxu0 0.0
  %2297 = vmatpush.msra.mxu0 %v1767
  %2298 = vmatpush.msra.mxu0 %v1759
  %2299 = vmatpush.msra.mxu0 %v1751
  %2300 = vmatpush.msra.mxu0 %v1743
  %2301 = vmatmul.f32.gmra.mxu0 %v1783
  %v2302 = vpop.f32.mrf.mxu0
  %v2303 = vadd.f32 0.0, %v2302
  %2304 = vdwg.mxu0
  %2305 = vmatpush.msra.mxu0 0.0
  %2306 = vmatpush.msra.mxu0 0.0
  %2307 = vmatpush.msra.mxu0 0.0
  %2308 = vmatpush.msra.mxu0 0.0
  %2309 = vmatpush.msra.mxu0 0.0
  %2310 = vmatpush.msra.mxu0 0.0
  %2311 = vmatpush.msra.mxu0 0.0
  %2312 = vmatpush.msra.mxu0 0.0
  %2313 = vmatpush.msra.mxu0 0.0
  %2314 = vmatpush.msra.mxu0 0.0
  %2315 = vmatpush.msra.mxu0 0.0
  %2316 = vmatpush.msra.mxu0 0.0
  %2317 = vmatpush.msra.mxu0 %v1768
  %2318 = vmatpush.msra.mxu0 %v1760
  %2319 = vmatpush.msra.mxu0 %v1752
  %2320 = vmatpush.msra.mxu0 %v1744
  %2321 = vmatmul.f32.gmra.mxu0 %v1783
  %v2322 = vpop.f32.mrf.mxu0
  %v2323 = vadd.f32 0.0, %v2322
  %2324 = vdwg.mxu0
  %2325 = vmatpush.msra.mxu0 0.0
  %2326 = vmatpush.msra.mxu0 0.0
  %2327 = vmatpush.msra.mxu0 0.0
  %2328 = vmatpush.msra.mxu0 0.0
  %2329 = vmatpush.msra.mxu0 0.0
  %2330 = vmatpush.msra.mxu0 0.0
  %2331 = vmatpush.msra.mxu0 0.0
  %2332 = vmatpush.msra.mxu0 0.0
  %2333 = vmatpush.msra.mxu0 0.0
  %2334 = vmatpush.msra.mxu0 0.0
  %2335 = vmatpush.msra.mxu0 0.0
  %2336 = vmatpush.msra.mxu0 0.0
  %2337 = vmatpush.msra.mxu0 %v1769
  %2338 = vmatpush.msra.mxu0 %v1761
  %2339 = vmatpush.msra.mxu0 %v1753
  %2340 = vmatpush.msra.mxu0 %v1745
  %2341 = vmatmul.f32.gmra.mxu0 %v1783
  %v2342 = vpop.f32.mrf.mxu0
  %v2343 = vadd.f32 0.0, %v2342
  %2344 = vdwg.mxu0
  %2345 = vmatpush.msra.mxu0 0.0
  %2346 = vmatpush.msra.mxu0 0.0
  %2347 = vmatpush.msra.mxu0 0.0
  %2348 = vmatpush.msra.mxu0 0.0
  %2349 = vmatpush.msra.mxu0 0.0
  %2350 = vmatpush.msra.mxu0 0.0
  %2351 = vmatpush.msra.mxu0 0.0
  %2352 = vmatpush.msra.mxu0 0.0
  %2353 = vmatpush.msra.mxu0 0.0
  %2354 = vmatpush.msra.mxu0 0.0
  %2355 = vmatpush.msra.mxu0 0.0
  %2356 = vmatpush.msra.mxu0 0.0
  %2357 = vmatpush.msra.mxu0 %v1770
  %2358 = vmatpush.msra.mxu0 %v1762
  %2359 = vmatpush.msra.mxu0 %v1754
  %2360 = vmatpush.msra.mxu0 %v1746
  %2361 = vmatmul.f32.gmra.mxu0 %v1783
  %v2362 = vpop.f32.mrf.mxu0
  %v2363 = vadd.f32 0.0, %v2362
  %2364 = vdwg.mxu0
  %2365 = vmatpush.msra.mxu0 0.0
  %2366 = vmatpush.msra.mxu0 0.0
  %2367 = vmatpush.msra.mxu0 0.0
  %2368 = vmatpush.msra.mxu0 0.0
  %2369 = vmatpush.msra.mxu0 0.0
  %2370 = vmatpush.msra.mxu0 0.0
  %2371 = vmatpush.msra.mxu0 0.0
  %2372 = vmatpush.msra.mxu0 0.0
  %2373 = vmatpush.msra.mxu0 0.0
  %2374 = vmatpush.msra.mxu0 0.0
  %2375 = vmatpush.msra.mxu0 0.0
  %2376 = vmatpush.msra.mxu0 0.0
  %2377 = vmatpush.msra.mxu0 %v1771
  %2378 = vmatpush.msra.mxu0 %v1763
  %2379 = vmatpush.msra.mxu0 %v1755
  %2380 = vmatpush.msra.mxu0 %v1747
  %2381 = vmatmul.f32.gmra.mxu0 %v1783
  %v2382 = vpop.f32.mrf.mxu0
  %v2383 = vadd.f32 0.0, %v2382
  %2384 = vdwg.mxu0
  %2385 = vmatpush.msra.mxu0 0.0
  %2386 = vmatpush.msra.mxu0 0.0
  %2387 = vmatpush.msra.mxu0 0.0
  %2388 = vmatpush.msra.mxu0 0.0
  %2389 = vmatpush.msra.mxu0 0.0
  %2390 = vmatpush.msra.mxu0 0.0
  %2391 = vmatpush.msra.mxu0 0.0
  %2392 = vmatpush.msra.mxu0 0.0
  %2393 = vmatpush.msra.mxu0 0.0
  %2394 = vmatpush.msra.mxu0 0.0
  %2395 = vmatpush.msra.mxu0 0.0
  %2396 = vmatpush.msra.mxu0 0.0
  %2397 = vmatpush.msra.mxu0 %v1772
  %2398 = vmatpush.msra.mxu0 %v1764
  %2399 = vmatpush.msra.mxu0 %v1756
  %2400 = vmatpush.msra.mxu0 %v1748
  %2401 = vmatmul.f32.gmra.mxu0 %v1783
  %v2402 = vpop.f32.mrf.mxu0
  %v2403 = vadd.f32 0.0, %v2402
  %2404 = vdwg.mxu0
  %2405 = vmatpush.msra.mxu0 0.0
  %2406 = vmatpush.msra.mxu0 0.0
  %2407 = vmatpush.msra.mxu0 0.0
  %2408 = vmatpush.msra.mxu0 0.0
  %2409 = vmatpush.msra.mxu0 0.0
  %2410 = vmatpush.msra.mxu0 0.0
  %2411 = vmatpush.msra.mxu0 0.0
  %2412 = vmatpush.msra.mxu0 0.0
  %2413 = vmatpush.msra.mxu0 0.0
  %2414 = vmatpush.msra.mxu0 0.0
  %2415 = vmatpush.msra.mxu0 0.0
  %2416 = vmatpush.msra.mxu0 0.0
  %2417 = vmatpush.msra.mxu0 %v1773
  %2418 = vmatpush.msra.mxu0 %v1765
  %2419 = vmatpush.msra.mxu0 %v1757
  %2420 = vmatpush.msra.mxu0 %v1749
  %2421 = vmatmul.f32.gmra.mxu0 %v1783
  %v2422 = vpop.f32.mrf.mxu0
  %v2423 = vadd.f32 0.0, %v2422
  %2424 = vdwg.mxu0
  %v2425 = vmul.f32 %v1803, %v1803
  %v2426 = vmul.f32 %v1823, %v1823
  %v2427 = vmul.f32 %v1843, %v1843
  %v2428 = vmul.f32 %v1863, %v1863
  %v2429 = vmul.f32 %v1883, %v1883
  %v2430 = vmul.f32 %v1903, %v1903
  %v2431 = vmul.f32 %v1923, %v1923
  %v2432 = vmul.f32 %v1943, %v1943
  %v2441 = vrot.slane %v1823, 7
  %v2442 = vrot.slane %v1843, 6
  %v2443 = vrot.slane %v1863, 5
  %v2444 = vrot.slane %v1883, 4
  %v2445 = vrot.slane %v1903, 3
  %v2446 = vrot.slane %v1923, 2
  %v2447 = vrot.slane %v1943, 1
  %vm2448 = vcmask 1040384
  %v2449 = vsel %vm2448, %v1803, %v2441
  %vm2450 = vcmask 1042434
  %v2451 = vsel %vm2450, %v2442, %v2443
  %vm2452 = vcmask 1041408
  %v2453 = vsel %vm2452, %v2449, %v2451
  %vm2454 = vcmask 1044484
  %v2455 = vsel %vm2454, %v2444, %v2445
  %vm2456 = vcmask 1046534
  %v2457 = vsel %vm2456, %v2446, %v2447
  %vm2458 = vcmask 1045508
  %v2459 = vsel %vm2458, %v2455, %v2457
  %vm2460 = vcmask 1043456
  %v2461 = vsel %vm2460, %v2453, %v2459
  %2463 = vst [vmem:[%s7] ss:$8 sm:$0xf] %v2461
  %2464 = vst [vmem:[%s7] ss:$8 sm:$0xf0] %v2461
  %v2473 = vrot.slane %v1983, 7
  %v2474 = vrot.slane %v2003, 6
  %v2475 = vrot.slane %v2023, 5
  %v2476 = vrot.slane %v2043, 4
  %v2477 = vrot.slane %v2063, 3
  %v2478 = vrot.slane %v2083, 2
  %v2479 = vrot.slane %v2103, 1
  %v2480 = vsel %vm2448, %v1963, %v2473
  %v2481 = vsel %vm2450, %v2474, %v2475
  %v2482 = vsel %vm2452, %v2480, %v2481
  %v2483 = vsel %vm2454, %v2476, %v2477
  %v2484 = vsel %vm2456, %v2478, %v2479
  %v2485 = vsel %vm2458, %v2483, %v2484
  %v2486 = vsel %vm2460, %v2482, %v2485
  %s2488 = scalar_lea.vmem %s7, 1
  %2489 = vst [vmem:[%s2488] ss:$8 sm:$0xf] %v2486
  %2490 = vst [vmem:[%s2488] ss:$8 sm:$0xf0] %v2486
  %s2491 = scalar_lea.vmem %s7, 2
  %2492 = vst [vmem:[%s2491] ss:$8 sm:$0xf] 1.0
  %2493 = vst [vmem:[%s2491] ss:$8 sm:$0xf0] 1.0
  %s2494 = scalar_lea.vmem %s7, 3
  %2495 = vst [vmem:[%s2494] ss:$8 sm:$0xf] %v2461
  %2496 = vst [vmem:[%s2494] ss:$8 sm:$0xf0] %v2461
  %v2505 = vrot.slane %v2426, 7
  %v2506 = vrot.slane %v2427, 6
  %v2507 = vrot.slane %v2428, 5
  %v2508 = vrot.slane %v2429, 4
  %v2509 = vrot.slane %v2430, 3
  %v2510 = vrot.slane %v2431, 2
  %v2511 = vrot.slane %v2432, 1
  %v2512 = vsel %vm2448, %v2425, %v2505
  %v2513 = vsel %vm2450, %v2506, %v2507
  %v2514 = vsel %vm2452, %v2512, %v2513
  %v2515 = vsel %vm2454, %v2508, %v2509
  %v2516 = vsel %vm2456, %v2510, %v2511
  %v2517 = vsel %vm2458, %v2515, %v2516
  %v2518 = vsel %vm2460, %v2514, %v2517
  %s2520 = scalar_lea.vmem %s7, 4
  %2521 = vst [vmem:[%s2520] ss:$8 sm:$0xf] %v2518
  %2522 = vst [vmem:[%s2520] ss:$8 sm:$0xf0] %v2518
  %v2531 = vrot.slane %v2143, 7
  %v2532 = vrot.slane %v2163, 6
  %v2533 = vrot.slane %v2183, 5
  %v2534 = vrot.slane %v2203, 4
  %v2535 = vrot.slane %v2223, 3
  %v2536 = vrot.slane %v2243, 2
  %v2537 = vrot.slane %v2263, 1
  %v2538 = vsel %vm2448, %v2123, %v2531
  %v2539 = vsel %vm2450, %v2532, %v2533
  %v2540 = vsel %vm2452, %v2538, %v2539
  %v2541 = vsel %vm2454, %v2534, %v2535
  %v2542 = vsel %vm2456, %v2536, %v2537
  %v2543 = vsel %vm2458, %v2541, %v2542
  %v2544 = vsel %vm2460, %v2540, %v2543
  %s2546 = scalar_lea.vmem %s7, 5
  %2547 = vst [vmem:[%s2546] ss:$8 sm:$0xf] %v2544
  %2548 = vst [vmem:[%s2546] ss:$8 sm:$0xf0] %v2544
  %v2549 = vmul.f32 %v1803, %v2123
  %v2550 = vmul.f32 %v1823, %v2143
  %v2551 = vmul.f32 %v1843, %v2163
  %v2552 = vmul.f32 %v1863, %v2183
  %v2553 = vmul.f32 %v1883, %v2203
  %v2554 = vmul.f32 %v1903, %v2223
  %v2555 = vmul.f32 %v1923, %v2243
  %v2556 = vmul.f32 %v1943, %v2263
  %v2565 = vrot.slane %v2550, 7
  %v2566 = vrot.slane %v2551, 6
  %v2567 = vrot.slane %v2552, 5
  %v2568 = vrot.slane %v2553, 4
  %v2569 = vrot.slane %v2554, 3
  %v2570 = vrot.slane %v2555, 2
  %v2571 = vrot.slane %v2556, 1
  %v2572 = vsel %vm2448, %v2549, %v2565
  %v2573 = vsel %vm2450, %v2566, %v2567
  %v2574 = vsel %vm2452, %v2572, %v2573
  %v2575 = vsel %vm2454, %v2568, %v2569
  %v2576 = vsel %vm2456, %v2570, %v2571
  %v2577 = vsel %vm2458, %v2575, %v2576
  %v2578 = vsel %vm2460, %v2574, %v2577
  %s2580 = scalar_lea.vmem %s7, 6
  %2581 = vst [vmem:[%s2580] ss:$8 sm:$0xf] %v2578
  %2582 = vst [vmem:[%s2580] ss:$8 sm:$0xf0] %v2578
  %v2583 = vmul.f32 %v2425, %v2123
  %v2584 = vmul.f32 %v2426, %v2143
  %v2585 = vmul.f32 %v2427, %v2163
  %v2586 = vmul.f32 %v2428, %v2183
  %v2587 = vmul.f32 %v2429, %v2203
  %v2588 = vmul.f32 %v2430, %v2223
  %v2589 = vmul.f32 %v2431, %v2243
  %v2590 = vmul.f32 %v2432, %v2263
  %v2599 = vrot.slane %v2584, 7
  %v2600 = vrot.slane %v2585, 6
  %v2601 = vrot.slane %v2586, 5
  %v2602 = vrot.slane %v2587, 4
  %v2603 = vrot.slane %v2588, 3
  %v2604 = vrot.slane %v2589, 2
  %v2605 = vrot.slane %v2590, 1
  %v2606 = vsel %vm2448, %v2583, %v2599
  %v2607 = vsel %vm2450, %v2600, %v2601
  %v2608 = vsel %vm2452, %v2606, %v2607
  %v2609 = vsel %vm2454, %v2602, %v2603
  %v2610 = vsel %vm2456, %v2604, %v2605
  %v2611 = vsel %vm2458, %v2609, %v2610
  %v2612 = vsel %vm2460, %v2608, %v2611
  %s2614 = scalar_lea.vmem %s7, 7
  %2615 = vst [vmem:[%s2614] ss:$8 sm:$0xf] %v2612
  %2616 = vst [vmem:[%s2614] ss:$8 sm:$0xf0] %v2612
  %v2625 = vrot.slane %v2303, 7
  %v2626 = vrot.slane %v2323, 6
  %v2627 = vrot.slane %v2343, 5
  %v2628 = vrot.slane %v2363, 4
  %v2629 = vrot.slane %v2383, 3
  %v2630 = vrot.slane %v2403, 2
  %v2631 = vrot.slane %v2423, 1
  %v2632 = vsel %vm2448, %v2283, %v2625
  %v2633 = vsel %vm2450, %v2626, %v2627
  %v2634 = vsel %vm2452, %v2632, %v2633
  %v2635 = vsel %vm2454, %v2628, %v2629
  %v2636 = vsel %vm2456, %v2630, %v2631
  %v2637 = vsel %vm2458, %v2635, %v2636
  %v2638 = vsel %vm2460, %v2634, %v2637
  %s2640 = scalar_lea.vmem %s7, 64
  %2641 = vst [vmem:[%s2640] ss:$8 sm:$0xf] %v2638
  %2642 = vst [vmem:[%s2640] ss:$8 sm:$0xf0] %v2638
  %v2643 = vmul.f32 %v1803, %v2283
  %v2644 = vmul.f32 %v1823, %v2303
  %v2645 = vmul.f32 %v1843, %v2323
  %v2646 = vmul.f32 %v1863, %v2343
  %v2647 = vmul.f32 %v1883, %v2363
  %v2648 = vmul.f32 %v1903, %v2383
  %v2649 = vmul.f32 %v1923, %v2403
  %v2650 = vmul.f32 %v1943, %v2423
  %v2659 = vrot.slane %v2644, 7
  %v2660 = vrot.slane %v2645, 6
  %v2661 = vrot.slane %v2646, 5
  %v2662 = vrot.slane %v2647, 4
  %v2663 = vrot.slane %v2648, 3
  %v2664 = vrot.slane %v2649, 2
  %v2665 = vrot.slane %v2650, 1
  %v2666 = vsel %vm2448, %v2643, %v2659
  %v2667 = vsel %vm2450, %v2660, %v2661
  %v2668 = vsel %vm2452, %v2666, %v2667
  %v2669 = vsel %vm2454, %v2662, %v2663
  %v2670 = vsel %vm2456, %v2664, %v2665
  %v2671 = vsel %vm2458, %v2669, %v2670
  %v2672 = vsel %vm2460, %v2668, %v2671
  %s2674 = scalar_lea.vmem %s7, 65
  %2675 = vst [vmem:[%s2674] ss:$8 sm:$0xf] %v2672
  %2676 = vst [vmem:[%s2674] ss:$8 sm:$0xf0] %v2672
  %v2677 = vmul.f32 %v2425, %v2283
  %v2678 = vmul.f32 %v2426, %v2303
  %v2679 = vmul.f32 %v2427, %v2323
  %v2680 = vmul.f32 %v2428, %v2343
  %v2681 = vmul.f32 %v2429, %v2363
  %v2682 = vmul.f32 %v2430, %v2383
  %v2683 = vmul.f32 %v2431, %v2403
  %v2684 = vmul.f32 %v2432, %v2423
  %v2693 = vrot.slane %v2678, 7
  %v2694 = vrot.slane %v2679, 6
  %v2695 = vrot.slane %v2680, 5
  %v2696 = vrot.slane %v2681, 4
  %v2697 = vrot.slane %v2682, 3
  %v2698 = vrot.slane %v2683, 2
  %v2699 = vrot.slane %v2684, 1
  %v2700 = vsel %vm2448, %v2677, %v2693
  %v2701 = vsel %vm2450, %v2694, %v2695
  %v2702 = vsel %vm2452, %v2700, %v2701
  %v2703 = vsel %vm2454, %v2696, %v2697
  %v2704 = vsel %vm2456, %v2698, %v2699
  %v2705 = vsel %vm2458, %v2703, %v2704
  %v2706 = vsel %vm2460, %v2702, %v2705
  %s2708 = scalar_lea.vmem %s7, 66
  %2709 = vst [vmem:[%s2708] ss:$8 sm:$0xf] %v2706
  %2710 = vst [vmem:[%s2708] ss:$8 sm:$0xf0] %v2706
  // Predicated region
  $region30: #{deepmod_forward.1} parent=0 // pred_check
    _
  $region31: #{deepmod_forward.1} parent=0 // pred_check_branch
    %2712 = sbr.rel (0) target = $region33
  $region32: #{deepmod_forward.1} parent=0 // pred_region
    _
  $region33: #{deepmod_forward.1} parent=0 // pred_fallthru
    _
  // Predicated region
  $region34: #{deepmod_forward.1} parent=0 // pred_check
    _
  $region35: #{deepmod_forward.1} parent=0 // pred_check_branch
    %2714 = sbr.rel (0) target = $region37
  $region36: #{deepmod_forward.1} parent=0 // pred_region
    _
  $region37: #{deepmod_forward.1} parent=0 // pred_fallthru
    _

</llo_original>
